<compile_context>
chip_gen: v7x
topology: tpu7x:2x2x1
jax: 0.10.0
libtpu: 0.0.40
codegen_flags: <defaults>
</compile_context>

<pallas_src>
import functools

import jax
import jax.numpy as jnp
from jax import lax
from jax.experimental import pallas as pl
from jax.experimental.pallas import tpu as pltpu


_LANES = 128


def _round_up(x, m):
    return ((x + m - 1) // m) * m


def _cdiv(a, b):
    return -(-a // b)


def _pick_tile_rows(n_rows, n_sh_feat, sh_itemsize, vmem_budget_bytes=6 * 1024 * 1024):
    """Rows per grid step, sized so the double-buffered VMEM working set stays
    well under the smallest scoped-VMEM default (16 MiB v5e, 32 MiB v6e/v7x;
    v7x has only 64 MiB physical per TensorCore)."""
    # VMEM tiles are lane-padded to 128: two sh tiles + one packed (R,16) slab.
    bytes_per_row = 2 * _round_up(n_sh_feat, _LANES) * sh_itemsize + _LANES * 4
    tb = vmem_budget_bytes // (2 * bytes_per_row)      # x2 for double buffering
    tb = int(max(8, min(tb, 2048)))
    if tb >= n_rows:
        return n_rows                                  # single tile covers all rows
    return (tb // 8) * 8                               # sublane aligned


def _pred_loss_kernel(sh_hat_ref, sh_gt_ref, small_ref, out_ref, *,
                      tile_rows, n_rows):
    # ---- SH MSE (reduction='sum'): per-row partials, collapse once ----
    sh_h = sh_hat_ref[...].astype(jnp.float32)
    sh_g = sh_gt_ref[...].astype(jnp.float32)
    diff = sh_h - sh_g
    sh_rows = jnp.sum(diff * diff, axis=1, keepdims=True)         # (TB, 1)

    # ---- packed small operands: fixed-column static slices ----
    s = small_ref[...]                                            # (TB, 16) f32
    p1, ind1 = s[:, 0:1], s[:, 1:2]
    p2, ind2 = s[:, 2:3], s[:, 3:4]
    d1h, d1g = s[:, 4:7], s[:, 7:10]
    d2h, d2g = s[:, 10:13], s[:, 13:16]

    # ---- BCE (reduction='sum'); PyTorch clamps the log terms at -100 ----
    def bce_rows(p, y):
        logp = jnp.maximum(jnp.log(p), -100.0)
        log1mp = jnp.maximum(jnp.log1p(-p), -100.0)
        return -(y * logp + (1.0 - y) * log1mp)                   # (TB, 1)

    b1_rows = bce_rows(p1, ind1)
    b2_rows = bce_rows(p2, ind2)

    # ---- directional cosine losses (sum over the 3-vector, dim=-1) ----
    c1_rows = -jnp.abs(jnp.sum((d1h * ind1) * d1g, axis=1, keepdims=True))
    c2_rows = -jnp.abs(jnp.sum((d2h * ind2) * d2g, axis=1, keepdims=True))
    sp_rows = jnp.abs(jnp.sum(d1h * (d2h * ind2), axis=1, keepdims=True))

    # ---- mask padded rows of the tail tile (select, never multiply garbage) ----
    if n_rows % tile_rows != 0:
        base = pl.program_id(0) * tile_rows
        row_id = base + lax.broadcasted_iota(jnp.int32, (tile_rows, 1), 0)
        valid = row_id < n_rows
        sh_rows = jnp.where(valid, sh_rows, 0.0)
        b1_rows = jnp.where(valid, b1_rows, 0.0)
        b2_rows = jnp.where(valid, b2_rows, 0.0)
        c1_rows = jnp.where(valid, c1_rows, 0.0)
        c2_rows = jnp.where(valid, c2_rows, 0.0)
        sp_rows = jnp.where(valid, sp_rows, 0.0)

    sh_mse = jnp.sum(sh_rows)
    bce1 = jnp.sum(b1_rows)
    bce2 = jnp.sum(b2_rows)
    cos1 = jnp.sum(c1_rows)
    cos2 = jnp.sum(c2_rows)
    sep = jnp.sum(sp_rows)

    # ---- one packed vector store per grid step (no scalar SMEM stores) ----
    sub = lax.broadcasted_iota(jnp.int32, (8, _LANES), 0)
    blk = (jnp.where(sub == 0, sh_mse, 0.0)
           + jnp.where(sub == 1, bce1, 0.0)
           + jnp.where(sub == 2, bce2, 0.0)
           + jnp.where(sub == 3, cos1, 0.0)
           + jnp.where(sub == 4, cos2, 0.0)
           + jnp.where(sub == 5, sep, 0.0))
    out_ref[0] = blk


def pred_loss(out, sh_gt, dir_gt, ind_gt, weight=None, *, tile_rows=None,
              interpret=False):
    """Pallas implementation of PredLoss.forward.

    out = (sh_hat, p1_hat, p2_hat, dir1_hat, dir2_hat), channels last, all
    sharing the same leading (batch/voxel) dims. Returns (loss_dict, loss).
    """
    sh_hat, p1_hat, p2_hat, dir1_hat, dir2_hat = out
    if weight is None:
        weight = jnp.ones((6,), jnp.float32)
    w = jnp.asarray(weight, jnp.float32).reshape(6)

    f32 = jnp.float32
    n_rows = 1
    for d in p1_hat.shape[:-1]:
        n_rows *= int(d)

    # --- unpack_gt fused into ONE packed (R, 16) slab: a single concatenate ---
    # columns: [p1, ind1, p2, ind2, d1_hat(3), d1_gt(3), d2_hat(3), d2_gt(3)]
    slab = jnp.concatenate(
        [p1_hat.reshape(n_rows, 1).astype(f32),
         ind_gt[..., 0:1].reshape(n_rows, 1).astype(f32),
         p2_hat.reshape(n_rows, 1).astype(f32),
         ind_gt[..., 1:2].reshape(n_rows, 1).astype(f32),
         dir1_hat.reshape(n_rows, 3).astype(f32),
         dir_gt[..., 0:3].reshape(n_rows, 3).astype(f32),
         dir2_hat.reshape(n_rows, 3).astype(f32),
         dir_gt[..., 3:6].reshape(n_rows, 3).astype(f32)],
        axis=1)                                                   # (R, 16)

    # Big tensors: keep native dtype (no wrapper up-cast); cast in-kernel.
    sh_hat2 = sh_hat.reshape(n_rows, -1)
    sh_gt2 = sh_gt.reshape(n_rows, -1)
    n_sh_feat = int(sh_hat2.shape[1])
    sh_itemsize = sh_hat2.dtype.itemsize

    if tile_rows is None:
        tb = _pick_tile_rows(n_rows, n_sh_feat, sh_itemsize)
    else:
        tb = int(min(tile_rows, n_rows))
        if tb < n_rows:
            tb = max(8, (tb // 8) * 8)
    num_tiles = _cdiv(n_rows, tb)

    tile_vmem = tb * (2 * _round_up(n_sh_feat, _LANES) * sh_itemsize + _LANES * 4)
    vmem_limit = int(min(100 * 1024 * 1024, max(16 * 1024 * 1024, 4 * tile_vmem)))

    n_sh_elems = int(sh_hat2.size)
    cost = pl.CostEstimate(
        flops=3 * n_sh_elems + 64 * n_rows,
        transcendentals=4 * n_rows,
        bytes_accessed=(2 * n_sh_elems * sh_itemsize + n_rows * 16 * 4
                        + num_tiles * 8 * _LANES * 4),
    )

    kernel = functools.partial(_pred_loss_kernel, tile_rows=tb, n_rows=n_rows)

    partials = pl.pallas_call(
        kernel,
        grid=(num_tiles,),
        in_specs=[
            pl.BlockSpec((tb, n_sh_feat), lambda i: (i, 0)),
            pl.BlockSpec((tb, n_sh_feat), lambda i: (i, 0)),
            pl.BlockSpec((tb, 16), lambda i: (i, 0)),
        ],
        out_specs=pl.BlockSpec((1, 8, _LANES), lambda i: (i, 0, 0)),
        out_shape=jax.ShapeDtypeStruct((num_tiles, 8, _LANES), jnp.float32),
        compiler_params=pltpu.CompilerParams(
            dimension_semantics=("parallel",),
            vmem_limit_bytes=vmem_limit,
        ),
        cost_estimate=cost,
        interpret=interpret,
    )(sh_hat2, sh_gt2, slab)

    # Tiny epilogue on 6 scalars: cross-tile add + per-term weighting.
    terms = jnp.sum(partials[:, 0:6, 0], axis=0)                  # (6,)
    total = jnp.sum(w * terms)

    loss_dict = {
        "total": total,
        "sh_mse": terms[0],
        "dir1_bce": terms[1],
        "dir2_bce": terms[2],
        "dir1_cos": terms[3],
        "dir2_cos": terms[4],
        "sep_cos": terms[5],
    }
    return loss_dict, total


def _reference(out, sh_gt, dir_gt, ind_gt, weight):
    """Pure-JAX reference mirroring the PyTorch PredLoss module."""
    sh_hat, p1_hat, p2_hat, dir1_hat, dir2_hat = out
    ind1_gt = ind_gt[..., 0:1]
    ind2_gt = ind_gt[..., 1:2]
    dir1_gt = dir_gt[..., 0:3]
    dir2_gt = dir_gt[..., 3:6]

    sh_mse = jnp.sum((sh_hat - sh_gt) ** 2)

    def bce(p, y):
        return -jnp.sum(y * jnp.maximum(jnp.log(p), -100.0)
                        + (1 - y) * jnp.maximum(jnp.log1p(-p), -100.0))

    d1b = bce(p1_hat, ind1_gt)
    d2b = bce(p2_hat, ind2_gt)

    def dl(dh, dg, ind):
        return -jnp.sum(jnp.abs(jnp.sum((dh * ind) * dg, axis=-1)))

    d1c = dl(dir1_hat, dir1_gt, ind1_gt)
    d2c = dl(dir2_hat, dir2_gt, ind2_gt)
    sep = jnp.sum(jnp.abs(jnp.sum(dir1_hat * (dir2_hat * ind2_gt), axis=-1)))

    total = (weight[0] * sh_mse + weight[1] * d1b + weight[2] * d2b
             + weight[3] * d1c + weight[4] * d2c + weight[5] * sep)
    return total, (sh_mse, d1b, d2b, d1c, d2c, sep)


if __name__ == "__main__":
    key = jax.random.PRNGKey(0)
    ks = jax.random.split(key, 8)

    B, N, CSH = 2, 72, 16  # batch, voxels per batch (R = 144 rows), SH channels

    sh_hat = jax.random.normal(ks[0], (B, N, CSH), jnp.float32)
    sh_gt = jax.random.normal(ks[1], (B, N, CSH), jnp.float32)
    # probabilities strictly in (0, 1)
    p1_hat = jax.nn.sigmoid(jax.random.normal(ks[2], (B, N, 1), jnp.float32))
    p2_hat = jax.nn.sigmoid(jax.random.normal(ks[3], (B, N, 1), jnp.float32))
    dir1_hat = jax.random.normal(ks[4], (B, N, 3), jnp.float32)
    dir2_hat = jax.random.normal(ks[5], (B, N, 3), jnp.float32)
    dir_gt = jax.random.normal(ks[6], (B, N, 6), jnp.float32)
    ind_gt = jax.random.bernoulli(ks[7], 0.5, (B, N, 2)).astype(jnp.float32)

    # deterministic per-term weights (module default is np.ones(6))
    weight = jnp.array([1.0, 0.9, 0.8, 0.7, 0.6, 0.5], jnp.float32)
    out = (sh_hat, p1_hat, p2_hat, dir1_hat, dir2_hat)

    ref_total, ref_terms = _reference(out, sh_gt, dir_gt, ind_gt, weight)

    # 1) auto tile size (single-tile path at this small R)
    ld1, loss1 = pred_loss(out, sh_gt, dir_gt, ind_gt, weight)
    # 2) forced small tile: multi-tile pipeline + masked tail tile (144 % 64 != 0)
    ld2, loss2 = pred_loss(out, sh_gt, dir_gt, ind_gt, weight, tile_rows=64)
    jax.block_until_ready((loss1, loss2))

    term_names = ("sh_mse", "dir1_bce", "dir2_bce", "dir1_cos", "dir2_cos", "sep_cos")
    for ld, loss in ((ld1, loss1), (ld2, loss2)):
        assert jnp.allclose(loss, ref_total, rtol=1e-4, atol=1e-3), (loss, ref_total)
        for name, ref_v in zip(term_names, ref_terms):
            assert jnp.allclose(ld[name], ref_v, rtol=1e-4, atol=1e-3), (
                name, ld[name], ref_v)

    print("KERNEL_OK")
</pallas_src>

<mosaic_0001>
module attributes {stable_mosaic.version = 11 : i64} {
  func.func @_pred_loss_kernel(%arg0: i32, %arg1: memref<144x16xf32, #tpu.memory_space<vmem>>, %arg2: memref<144x16xf32, #tpu.memory_space<vmem>>, %arg3: memref<144x16xf32, #tpu.memory_space<vmem>>, %arg4: memref<1x8x128xf32, #tpu.memory_space<vmem>>) attributes {dimension_semantics = [#tpu.dimension_semantics<parallel>], iteration_bounds = array<i64: 1>, scalar_prefetch = 0 : i64, scratch_operands = 0 : i64, tpu.core_type = #tpu.core_type<tc>, window_params = [{transform_indices = @transform_0, window_bounds = array<i64: 144, 16>}, {transform_indices = @transform_1, window_bounds = array<i64: 144, 16>}, {transform_indices = @transform_2, window_bounds = array<i64: 144, 16>}, {transform_indices = @transform_3, window_bounds = array<i64: 1, 8, 128>}]} {
    %c0 = arith.constant 0 : index
    %c0_0 = arith.constant 0 : index
    %0 = vector.load %arg1[%c0, %c0_0] : memref<144x16xf32, #tpu.memory_space<vmem>>, vector<144x16xf32>
    %c0_1 = arith.constant 0 : index
    %c0_2 = arith.constant 0 : index
    %1 = vector.load %arg2[%c0_1, %c0_2] : memref<144x16xf32, #tpu.memory_space<vmem>>, vector<144x16xf32>
    %2 = arith.subf %0, %1 : vector<144x16xf32>
    %3 = arith.mulf %2, %2 : vector<144x16xf32>
    %cst = arith.constant dense<0.000000e+00> : vector<144xf32>
    %4 = vector.multi_reduction <add>, %3, %cst [1] : vector<144x16xf32> to vector<144xf32>
    %5 = vector.shape_cast %4 : vector<144xf32> to vector<144x1xf32>
    %c0_3 = arith.constant 0 : index
    %c0_4 = arith.constant 0 : index
    %6 = vector.load %arg3[%c0_3, %c0_4] : memref<144x16xf32, #tpu.memory_space<vmem>>, vector<144x16xf32>
    %7 = vector.extract_strided_slice %6 {offsets = [0, 0], sizes = [144, 1], strides = [1, 1]} : vector<144x16xf32> to vector<144x1xf32>
    %8 = vector.extract_strided_slice %6 {offsets = [0, 1], sizes = [144, 1], strides = [1, 1]} : vector<144x16xf32> to vector<144x1xf32>
    %9 = vector.extract_strided_slice %6 {offsets = [0, 2], sizes = [144, 1], strides = [1, 1]} : vector<144x16xf32> to vector<144x1xf32>
    %10 = vector.extract_strided_slice %6 {offsets = [0, 3], sizes = [144, 1], strides = [1, 1]} : vector<144x16xf32> to vector<144x1xf32>
    %11 = vector.extract_strided_slice %6 {offsets = [0, 4], sizes = [144, 3], strides = [1, 1]} : vector<144x16xf32> to vector<144x3xf32>
    %12 = vector.extract_strided_slice %6 {offsets = [0, 7], sizes = [144, 3], strides = [1, 1]} : vector<144x16xf32> to vector<144x3xf32>
    %13 = vector.extract_strided_slice %6 {offsets = [0, 10], sizes = [144, 3], strides = [1, 1]} : vector<144x16xf32> to vector<144x3xf32>
    %14 = vector.extract_strided_slice %6 {offsets = [0, 13], sizes = [144, 3], strides = [1, 1]} : vector<144x16xf32> to vector<144x3xf32>
    %15 = math.log %7 : vector<144x1xf32>
    %cst_5 = arith.constant -1.000000e+02 : f32
    %16 = vector.broadcast %cst_5 : f32 to vector<144x1xf32>
    %17 = arith.maximumf %15, %16 : vector<144x1xf32>
    %cst_6 = arith.constant 0.000000e+00 : f32
    %18 = vector.broadcast %cst_6 : f32 to vector<144x1xf32>
    %19 = arith.subf %18, %7 : vector<144x1xf32>
    %20 = math.log1p %19 : vector<144x1xf32>
    %cst_7 = arith.constant -1.000000e+02 : f32
    %21 = vector.broadcast %cst_7 : f32 to vector<144x1xf32>
    %22 = arith.maximumf %20, %21 : vector<144x1xf32>
    %23 = arith.mulf %8, %17 : vector<144x1xf32>
    %cst_8 = arith.constant 1.000000e+00 : f32
    %24 = vector.broadcast %cst_8 : f32 to vector<144x1xf32>
    %25 = arith.subf %24, %8 : vector<144x1xf32>
    %26 = arith.mulf %25, %22 : vector<144x1xf32>
    %27 = arith.addf %23, %26 : vector<144x1xf32>
    %cst_9 = arith.constant 0.000000e+00 : f32
    %28 = vector.broadcast %cst_9 : f32 to vector<144x1xf32>
    %29 = arith.subf %28, %27 : vector<144x1xf32>
    %30 = math.log %9 : vector<144x1xf32>
    %cst_10 = arith.constant -1.000000e+02 : f32
    %31 = vector.broadcast %cst_10 : f32 to vector<144x1xf32>
    %32 = arith.maximumf %30, %31 : vector<144x1xf32>
    %cst_11 = arith.constant 0.000000e+00 : f32
    %33 = vector.broadcast %cst_11 : f32 to vector<144x1xf32>
    %34 = arith.subf %33, %9 : vector<144x1xf32>
    %35 = math.log1p %34 : vector<144x1xf32>
    %cst_12 = arith.constant -1.000000e+02 : f32
    %36 = vector.broadcast %cst_12 : f32 to vector<144x1xf32>
    %37 = arith.maximumf %35, %36 : vector<144x1xf32>
    %38 = arith.mulf %10, %32 : vector<144x1xf32>
    %cst_13 = arith.constant 1.000000e+00 : f32
    %39 = vector.broadcast %cst_13 : f32 to vector<144x1xf32>
    %40 = arith.subf %39, %10 : vector<144x1xf32>
    %41 = arith.mulf %40, %37 : vector<144x1xf32>
    %42 = arith.addf %38, %41 : vector<144x1xf32>
    %cst_14 = arith.constant 0.000000e+00 : f32
    %43 = vector.broadcast %cst_14 : f32 to vector<144x1xf32>
    %44 = arith.subf %43, %42 : vector<144x1xf32>
    %45 = vector.broadcast %8 : vector<144x1xf32> to vector<144x3xf32>
    %46 = arith.mulf %11, %45 : vector<144x3xf32>
    %47 = arith.mulf %46, %12 : vector<144x3xf32>
    %cst_15 = arith.constant dense<0.000000e+00> : vector<144xf32>
    %48 = vector.multi_reduction <add>, %47, %cst_15 [1] : vector<144x3xf32> to vector<144xf32>
    %49 = vector.shape_cast %48 : vector<144xf32> to vector<144x1xf32>
    %50 = math.absf %49 : vector<144x1xf32>
    %cst_16 = arith.constant 0.000000e+00 : f32
    %51 = vector.broadcast %cst_16 : f32 to vector<144x1xf32>
    %52 = arith.subf %51, %50 : vector<144x1xf32>
    %53 = vector.broadcast %10 : vector<144x1xf32> to vector<144x3xf32>
    %54 = arith.mulf %13, %53 : vector<144x3xf32>
    %55 = arith.mulf %54, %14 : vector<144x3xf32>
    %cst_17 = arith.constant dense<0.000000e+00> : vector<144xf32>
    %56 = vector.multi_reduction <add>, %55, %cst_17 [1] : vector<144x3xf32> to vector<144xf32>
    %57 = vector.shape_cast %56 : vector<144xf32> to vector<144x1xf32>
    %58 = math.absf %57 : vector<144x1xf32>
    %cst_18 = arith.constant 0.000000e+00 : f32
    %59 = vector.broadcast %cst_18 : f32 to vector<144x1xf32>
    %60 = arith.subf %59, %58 : vector<144x1xf32>
    %61 = vector.broadcast %10 : vector<144x1xf32> to vector<144x3xf32>
    %62 = arith.mulf %13, %61 : vector<144x3xf32>
    %63 = arith.mulf %11, %62 : vector<144x3xf32>
    %cst_19 = arith.constant dense<0.000000e+00> : vector<144xf32>
    %64 = vector.multi_reduction <add>, %63, %cst_19 [1] : vector<144x3xf32> to vector<144xf32>
    %65 = vector.shape_cast %64 : vector<144xf32> to vector<144x1xf32>
    %66 = math.absf %65 : vector<144x1xf32>
    %67 = vector.shape_cast %5 : vector<144x1xf32> to vector<1x144x1xf32>
    %cst_20 = arith.constant dense<0.000000e+00> : vector<1xf32>
    %68 = vector.multi_reduction <add>, %67, %cst_20 [1, 2] : vector<1x144x1xf32> to vector<1xf32>
    %69 = vector.shape_cast %68 : vector<1xf32> to vector<1x1x1xf32>
    %70 = vector.extract %69[0, 0, 0] : f32 from vector<1x1x1xf32>
    %71 = vector.shape_cast %29 : vector<144x1xf32> to vector<1x144x1xf32>
    %cst_21 = arith.constant dense<0.000000e+00> : vector<1xf32>
    %72 = vector.multi_reduction <add>, %71, %cst_21 [1, 2] : vector<1x144x1xf32> to vector<1xf32>
    %73 = vector.shape_cast %72 : vector<1xf32> to vector<1x1x1xf32>
    %74 = vector.extract %73[0, 0, 0] : f32 from vector<1x1x1xf32>
    %75 = vector.shape_cast %44 : vector<144x1xf32> to vector<1x144x1xf32>
    %cst_22 = arith.constant dense<0.000000e+00> : vector<1xf32>
    %76 = vector.multi_reduction <add>, %75, %cst_22 [1, 2] : vector<1x144x1xf32> to vector<1xf32>
    %77 = vector.shape_cast %76 : vector<1xf32> to vector<1x1x1xf32>
    %78 = vector.extract %77[0, 0, 0] : f32 from vector<1x1x1xf32>
    %79 = vector.shape_cast %52 : vector<144x1xf32> to vector<1x144x1xf32>
    %cst_23 = arith.constant dense<0.000000e+00> : vector<1xf32>
    %80 = vector.multi_reduction <add>, %79, %cst_23 [1, 2] : vector<1x144x1xf32> to vector<1xf32>
    %81 = vector.shape_cast %80 : vector<1xf32> to vector<1x1x1xf32>
    %82 = vector.extract %81[0, 0, 0] : f32 from vector<1x1x1xf32>
    %83 = vector.shape_cast %60 : vector<144x1xf32> to vector<1x144x1xf32>
    %cst_24 = arith.constant dense<0.000000e+00> : vector<1xf32>
    %84 = vector.multi_reduction <add>, %83, %cst_24 [1, 2] : vector<1x144x1xf32> to vector<1xf32>
    %85 = vector.shape_cast %84 : vector<1xf32> to vector<1x1x1xf32>
    %86 = vector.extract %85[0, 0, 0] : f32 from vector<1x1x1xf32>
    %87 = vector.shape_cast %66 : vector<144x1xf32> to vector<1x144x1xf32>
    %cst_25 = arith.constant dense<0.000000e+00> : vector<1xf32>
    %88 = vector.multi_reduction <add>, %87, %cst_25 [1, 2] : vector<1x144x1xf32> to vector<1xf32>
    %89 = vector.shape_cast %88 : vector<1xf32> to vector<1x1x1xf32>
    %90 = vector.extract %89[0, 0, 0] : f32 from vector<1x1x1xf32>
    %91 = tpu.iota {dimensions = array<i32: 0>} : vector<8x128xi32>
    %c0_i32 = arith.constant 0 : i32
    %92 = vector.broadcast %c0_i32 : i32 to vector<8x128xi32>
    %93 = arith.cmpi eq, %91, %92 : vector<8x128xi32>
    %cst_26 = arith.constant 0.000000e+00 : f32
    %94 = vector.broadcast %70 : f32 to vector<8x128xf32>
    %95 = vector.broadcast %cst_26 : f32 to vector<8x128xf32>
    %96 = arith.select %93, %94, %95 : vector<8x128xi1>, vector<8x128xf32>
    %c1_i32 = arith.constant 1 : i32
    %97 = vector.broadcast %c1_i32 : i32 to vector<8x128xi32>
    %98 = arith.cmpi eq, %91, %97 : vector<8x128xi32>
    %cst_27 = arith.constant 0.000000e+00 : f32
    %99 = vector.broadcast %74 : f32 to vector<8x128xf32>
    %100 = vector.broadcast %cst_27 : f32 to vector<8x128xf32>
    %101 = arith.select %98, %99, %100 : vector<8x128xi1>, vector<8x128xf32>
    %102 = arith.addf %96, %101 : vector<8x128xf32>
    %c2_i32 = arith.constant 2 : i32
    %103 = vector.broadcast %c2_i32 : i32 to vector<8x128xi32>
    %104 = arith.cmpi eq, %91, %103 : vector<8x128xi32>
    %cst_28 = arith.constant 0.000000e+00 : f32
    %105 = vector.broadcast %78 : f32 to vector<8x128xf32>
    %106 = vector.broadcast %cst_28 : f32 to vector<8x128xf32>
    %107 = arith.select %104, %105, %106 : vector<8x128xi1>, vector<8x128xf32>
    %108 = arith.addf %102, %107 : vector<8x128xf32>
    %c3_i32 = arith.constant 3 : i32
    %109 = vector.broadcast %c3_i32 : i32 to vector<8x128xi32>
    %110 = arith.cmpi eq, %91, %109 : vector<8x128xi32>
    %cst_29 = arith.constant 0.000000e+00 : f32
    %111 = vector.broadcast %82 : f32 to vector<8x128xf32>
    %112 = vector.broadcast %cst_29 : f32 to vector<8x128xf32>
    %113 = arith.select %110, %111, %112 : vector<8x128xi1>, vector<8x128xf32>
    %114 = arith.addf %108, %113 : vector<8x128xf32>
    %c4_i32 = arith.constant 4 : i32
    %115 = vector.broadcast %c4_i32 : i32 to vector<8x128xi32>
    %116 = arith.cmpi eq, %91, %115 : vector<8x128xi32>
    %cst_30 = arith.constant 0.000000e+00 : f32
    %117 = vector.broadcast %86 : f32 to vector<8x128xf32>
    %118 = vector.broadcast %cst_30 : f32 to vector<8x128xf32>
    %119 = arith.select %116, %117, %118 : vector<8x128xi1>, vector<8x128xf32>
    %120 = arith.addf %114, %119 : vector<8x128xf32>
    %c5_i32 = arith.constant 5 : i32
    %121 = vector.broadcast %c5_i32 : i32 to vector<8x128xi32>
    %122 = arith.cmpi eq, %91, %121 : vector<8x128xi32>
    %cst_31 = arith.constant 0.000000e+00 : f32
    %123 = vector.broadcast %90 : f32 to vector<8x128xf32>
    %124 = vector.broadcast %cst_31 : f32 to vector<8x128xf32>
    %125 = arith.select %122, %123, %124 : vector<8x128xi1>, vector<8x128xf32>
    %126 = arith.addf %120, %125 : vector<8x128xf32>
    %c0_32 = arith.constant 0 : index
    %c0_33 = arith.constant 0 : index
    %c0_34 = arith.constant 0 : index
    %127 = vector.load %arg4[%c0_32, %c0_33, %c0_34] : memref<1x8x128xf32, #tpu.memory_space<vmem>>, vector<1x8x128xf32>
    %128 = vector.shape_cast %127 : vector<1x8x128xf32> to vector<8x128xf32>
    %129 = vector.shape_cast %126 : vector<8x128xf32> to vector<1x8x128xf32>
    tpu.vector_store %arg4[%c0_32, %c0_33, %c0_34], %129 {strides = array<i32>} : memref<1x8x128xf32, #tpu.memory_space<vmem>>, vector<1x8x128xf32>,
    return
  }
  func.func @transform_0(%arg0: i32) -> (i32, i32) {
    %c0_i32 = arith.constant 0 : i32
    %c0_i32_0 = arith.constant 0 : i32
    return %arg0, %c0_i32 : i32, i32
  }
  func.func @transform_1(%arg0: i32) -> (i32, i32) {
    %c0_i32 = arith.constant 0 : i32
    %c0_i32_0 = arith.constant 0 : i32
    return %arg0, %c0_i32 : i32, i32
  }
  func.func @transform_2(%arg0: i32) -> (i32, i32) {
    %c0_i32 = arith.constant 0 : i32
    %c0_i32_0 = arith.constant 0 : i32
    return %arg0, %c0_i32 : i32, i32
  }
  func.func @transform_3(%arg0: i32) -> (i32, i32, i32) {
    %c0_i32 = arith.constant 0 : i32
    %c0_i32_0 = arith.constant 0 : i32
    %c0_i32_1 = arith.constant 0 : i32
    return %arg0, %c0_i32, %c0_i32_0 : i32, i32, i32
  }
}

</mosaic_0001>

<llo_original>
// kernel: tpu_custom_call.1
$region0: #{tpu_custom_call.1}
  #allocation0 [shape = 'u32[]', space=smem, size = 0x4, offset = 0x4, fixed_abs, tag = 'smem constant byte address 0x4 - core index']
  #allocation1 [shape = 'u32[144,128]{1,0:T(1,128)}', space=vmem, size = 0x12000, scoped, tag = 'internal scratch']
  %s0 = inlined_call_operand.vmem [shape: f32[144,16], index: 0, kind: input, shape index: {}]
  %s1 = inlined_call_operand.vmem [shape: f32[144,16], index: 1, kind: input, shape index: {}]
  %s2 = inlined_call_operand.vmem [shape: f32[144,16], index: 2, kind: input, shape index: {}]
  %s3 = inlined_call_operand.hbm [shape: f32[1,8,128], index: 3, kind: output, shape index: {}]
  %s4 = sld [smem:[#allocation0]]
  $region22: #{tpu_custom_call.1} parent=0
    _
  %s6 = ssub.s32 1, %s4
  %s7 = scalar_select 0, %s6, %s4
  $region1: #{tpu_custom_call.1} parent=0
    #allocation2 [shape = 'u8[4096]{0}', space=vmem, size = 0x1000, scoped, tag = 'output window, operand 0, single buffered']
    #allocation3 [shape = 's32[1]{0}', space=sflag, size = 0x4, scoped, tag = 'scoped memory for tpu_custom_call.1']
    %8 = vsyncpa [#allocation3], 0
    // Predicated region
    $region2: #{tpu_custom_call.1} parent=1 // pred_check
      _
    $region3: #{tpu_custom_call.1} parent=1 // pred_check_branch
      %10 = sbr.rel (0) target = $region5
    $region4: #{tpu_custom_call.1} parent=1 // pred_region
      _
    $region5: #{tpu_custom_call.1} parent=1 // pred_fallthru
      _
    // Predicated region
    $region6: #{tpu_custom_call.1} parent=1 // pred_check
      _
    $region7: #{tpu_custom_call.1} parent=1 // pred_check_branch
      %12 = sbr.rel (0) target = $region9
    $region8: #{tpu_custom_call.1} parent=1 // pred_region
      _
    $region9: #{tpu_custom_call.1} parent=1 // pred_fallthru
      _
    // Predicated region
    $region10: #{tpu_custom_call.1} parent=1 // pred_check
      _
    $region11: #{tpu_custom_call.1} parent=1 // pred_check_branch
      %14 = sbr.rel (0) target = $region13
    $region12: #{tpu_custom_call.1} parent=1 // pred_region
      _
    $region13: #{tpu_custom_call.1} parent=1 // pred_fallthru
      _
    %v15 = vld [vmem:[%s0] sm:$0xff]
    %v16 = vld [vmem:[%s0 + $0x8] sm:$0xff]
    %v17 = vld [vmem:[%s0 + $0x10] sm:$0xff]
    %v18 = vld [vmem:[%s0 + $0x18] sm:$0xff]
    %v19 = vld [vmem:[%s0 + $0x20] sm:$0xff]
    %v20 = vld [vmem:[%s0 + $0x28] sm:$0xff]
    %v21 = vld [vmem:[%s0 + $0x30] sm:$0xff]
    %v22 = vld [vmem:[%s0 + $0x38] sm:$0xff]
    %v23 = vld [vmem:[%s0 + $0x40] sm:$0xff]
    %v24 = vld [vmem:[%s0 + $0x48] sm:$0xff]
    %v25 = vld [vmem:[%s0 + $0x50] sm:$0xff]
    %v26 = vld [vmem:[%s0 + $0x58] sm:$0xff]
    %v27 = vld [vmem:[%s0 + $0x60] sm:$0xff]
    %v28 = vld [vmem:[%s0 + $0x68] sm:$0xff]
    %v29 = vld [vmem:[%s0 + $0x70] sm:$0xff]
    %v30 = vld [vmem:[%s0 + $0x78] sm:$0xff]
    %v31 = vld [vmem:[%s0 + $0x80] sm:$0xff]
    %v32 = vld [vmem:[%s0 + $0x88] sm:$0xff]
    %v33 = vld [vmem:[%s1] sm:$0xff]
    %v34 = vld [vmem:[%s1 + $0x8] sm:$0xff]
    %v35 = vld [vmem:[%s1 + $0x10] sm:$0xff]
    %v36 = vld [vmem:[%s1 + $0x18] sm:$0xff]
    %v37 = vld [vmem:[%s1 + $0x20] sm:$0xff]
    %v38 = vld [vmem:[%s1 + $0x28] sm:$0xff]
    %v39 = vld [vmem:[%s1 + $0x30] sm:$0xff]
    %v40 = vld [vmem:[%s1 + $0x38] sm:$0xff]
    %v41 = vld [vmem:[%s1 + $0x40] sm:$0xff]
    %v42 = vld [vmem:[%s1 + $0x48] sm:$0xff]
    %v43 = vld [vmem:[%s1 + $0x50] sm:$0xff]
    %v44 = vld [vmem:[%s1 + $0x58] sm:$0xff]
    %v45 = vld [vmem:[%s1 + $0x60] sm:$0xff]
    %v46 = vld [vmem:[%s1 + $0x68] sm:$0xff]
    %v47 = vld [vmem:[%s1 + $0x70] sm:$0xff]
    %v48 = vld [vmem:[%s1 + $0x78] sm:$0xff]
    %v49 = vld [vmem:[%s1 + $0x80] sm:$0xff]
    %v50 = vld [vmem:[%s1 + $0x88] sm:$0xff]
    %v51 = vsub.f32 %v15, %v33
    %v52 = vsub.f32 %v16, %v34
    %v53 = vsub.f32 %v17, %v35
    %v54 = vsub.f32 %v18, %v36
    %v55 = vsub.f32 %v19, %v37
    %v56 = vsub.f32 %v20, %v38
    %v57 = vsub.f32 %v21, %v39
    %v58 = vsub.f32 %v22, %v40
    %v59 = vsub.f32 %v23, %v41
    %v60 = vsub.f32 %v24, %v42
    %v61 = vsub.f32 %v25, %v43
    %v62 = vsub.f32 %v26, %v44
    %v63 = vsub.f32 %v27, %v45
    %v64 = vsub.f32 %v28, %v46
    %v65 = vsub.f32 %v29, %v47
    %v66 = vsub.f32 %v30, %v48
    %v67 = vsub.f32 %v31, %v49
    %v68 = vsub.f32 %v32, %v50
    %v69 = vmul.f32 %v51, %v51
    %v70 = vmul.f32 %v52, %v52
    %v71 = vmul.f32 %v53, %v53
    %v72 = vmul.f32 %v54, %v54
    %v73 = vmul.f32 %v55, %v55
    %v74 = vmul.f32 %v56, %v56
    %v75 = vmul.f32 %v57, %v57
    %v76 = vmul.f32 %v58, %v58
    %v77 = vmul.f32 %v59, %v59
    %v78 = vmul.f32 %v60, %v60
    %v79 = vmul.f32 %v61, %v61
    %v80 = vmul.f32 %v62, %v62
    %v81 = vmul.f32 %v63, %v63
    %v82 = vmul.f32 %v64, %v64
    %v83 = vmul.f32 %v65, %v65
    %v84 = vmul.f32 %v66, %v66
    %v85 = vmul.f32 %v67, %v67
    %v86 = vmul.f32 %v68, %v68
    %vm87 = vcmask 130048
    %v88 = vsel %vm87, %v69, 0.0
    %89 = vadd.xlane.f32.xlu0 %v88
    %v90 = vpop.xlane.xlu0 %89
    %v91 = vsel %vm87, %v70, 0.0
    %92 = vadd.xlane.f32.xlu0 %v91
    %v93 = vpop.xlane.xlu0 %92
    %v94 = vsel %vm87, %v71, 0.0
    %95 = vadd.xlane.f32.xlu0 %v94
    %v96 = vpop.xlane.xlu0 %95
    %v97 = vsel %vm87, %v72, 0.0
    %98 = vadd.xlane.f32.xlu0 %v97
    %v99 = vpop.xlane.xlu0 %98
    %v100 = vsel %vm87, %v73, 0.0
    %101 = vadd.xlane.f32.xlu0 %v100
    %v102 = vpop.xlane.xlu0 %101
    %v103 = vsel %vm87, %v74, 0.0
    %104 = vadd.xlane.f32.xlu0 %v103
    %v105 = vpop.xlane.xlu0 %104
    %v106 = vsel %vm87, %v75, 0.0
    %107 = vadd.xlane.f32.xlu0 %v106
    %v108 = vpop.xlane.xlu0 %107
    %v109 = vsel %vm87, %v76, 0.0
    %110 = vadd.xlane.f32.xlu0 %v109
    %v111 = vpop.xlane.xlu0 %110
    %v112 = vsel %vm87, %v77, 0.0
    %113 = vadd.xlane.f32.xlu0 %v112
    %v114 = vpop.xlane.xlu0 %113
    %v115 = vsel %vm87, %v78, 0.0
    %116 = vadd.xlane.f32.xlu0 %v115
    %v117 = vpop.xlane.xlu0 %116
    %v118 = vsel %vm87, %v79, 0.0
    %119 = vadd.xlane.f32.xlu0 %v118
    %v120 = vpop.xlane.xlu0 %119
    %v121 = vsel %vm87, %v80, 0.0
    %122 = vadd.xlane.f32.xlu0 %v121
    %v123 = vpop.xlane.xlu0 %122
    %v124 = vsel %vm87, %v81, 0.0
    %125 = vadd.xlane.f32.xlu0 %v124
    %v126 = vpop.xlane.xlu0 %125
    %v127 = vsel %vm87, %v82, 0.0
    %128 = vadd.xlane.f32.xlu0 %v127
    %v129 = vpop.xlane.xlu0 %128
    %v130 = vsel %vm87, %v83, 0.0
    %131 = vadd.xlane.f32.xlu0 %v130
    %v132 = vpop.xlane.xlu0 %131
    %v133 = vsel %vm87, %v84, 0.0
    %134 = vadd.xlane.f32.xlu0 %v133
    %v135 = vpop.xlane.xlu0 %134
    %v136 = vsel %vm87, %v85, 0.0
    %137 = vadd.xlane.f32.xlu0 %v136
    %v138 = vpop.xlane.xlu0 %137
    %v139 = vsel %vm87, %v86, 0.0
    %140 = vadd.xlane.f32.xlu0 %v139
    %v141 = vpop.xlane.xlu0 %140
    %v142 = vld [vmem:[%s2] sm:$0xff]
    %v143 = vld [vmem:[%s2 + $0x8] sm:$0xff]
    %v144 = vld [vmem:[%s2 + $0x10] sm:$0xff]
    %v145 = vld [vmem:[%s2 + $0x18] sm:$0xff]
    %v146 = vld [vmem:[%s2 + $0x20] sm:$0xff]
    %v147 = vld [vmem:[%s2 + $0x28] sm:$0xff]
    %v148 = vld [vmem:[%s2 + $0x30] sm:$0xff]
    %v149 = vld [vmem:[%s2 + $0x38] sm:$0xff]
    %v150 = vld [vmem:[%s2 + $0x40] sm:$0xff]
    %v151 = vld [vmem:[%s2 + $0x48] sm:$0xff]
    %v152 = vld [vmem:[%s2 + $0x50] sm:$0xff]
    %v153 = vld [vmem:[%s2 + $0x58] sm:$0xff]
    %v154 = vld [vmem:[%s2 + $0x60] sm:$0xff]
    %v155 = vld [vmem:[%s2 + $0x68] sm:$0xff]
    %v156 = vld [vmem:[%s2 + $0x70] sm:$0xff]
    %v157 = vld [vmem:[%s2 + $0x78] sm:$0xff]
    %v158 = vld [vmem:[%s2 + $0x80] sm:$0xff]
    %v159 = vld [vmem:[%s2 + $0x88] sm:$0xff]
    %v160 = vlog2.pop %v142
    %v161 = vmul.f32 %v160, 0.6931472
    %v162 = vlog2.pop %v143
    %v163 = vmul.f32 %v162, 0.6931472
    %v164 = vlog2.pop %v144
    %v165 = vmul.f32 %v164, 0.6931472
    %v166 = vlog2.pop %v145
    %v167 = vmul.f32 %v166, 0.6931472
    %v168 = vlog2.pop %v146
    %v169 = vmul.f32 %v168, 0.6931472
    %v170 = vlog2.pop %v147
    %v171 = vmul.f32 %v170, 0.6931472
    %v172 = vlog2.pop %v148
    %v173 = vmul.f32 %v172, 0.6931472
    %v174 = vlog2.pop %v149
    %v175 = vmul.f32 %v174, 0.6931472
    %v176 = vlog2.pop %v150
    %v177 = vmul.f32 %v176, 0.6931472
    %v178 = vlog2.pop %v151
    %v179 = vmul.f32 %v178, 0.6931472
    %v180 = vlog2.pop %v152
    %v181 = vmul.f32 %v180, 0.6931472
    %v182 = vlog2.pop %v153
    %v183 = vmul.f32 %v182, 0.6931472
    %v184 = vlog2.pop %v154
    %v185 = vmul.f32 %v184, 0.6931472
    %v186 = vlog2.pop %v155
    %v187 = vmul.f32 %v186, 0.6931472
    %v188 = vlog2.pop %v156
    %v189 = vmul.f32 %v188, 0.6931472
    %v190 = vlog2.pop %v157
    %v191 = vmul.f32 %v190, 0.6931472
    %v192 = vlog2.pop %v158
    %v193 = vmul.f32 %v192, 0.6931472
    %v194 = vlog2.pop %v159
    %v195 = vmul.f32 %v194, 0.6931472
    %v196 = vmax.f32 %v161, -100.0
    %v197 = vmax.f32 %v163, -100.0
    %v198 = vmax.f32 %v165, -100.0
    %v199 = vmax.f32 %v167, -100.0
    %v200 = vmax.f32 %v169, -100.0
    %v201 = vmax.f32 %v171, -100.0
    %v202 = vmax.f32 %v173, -100.0
    %v203 = vmax.f32 %v175, -100.0
    %v204 = vmax.f32 %v177, -100.0
    %v205 = vmax.f32 %v179, -100.0
    %v206 = vmax.f32 %v181, -100.0
    %v207 = vmax.f32 %v183, -100.0
    %v208 = vmax.f32 %v185, -100.0
    %v209 = vmax.f32 %v187, -100.0
    %v210 = vmax.f32 %v189, -100.0
    %v211 = vmax.f32 %v191, -100.0
    %v212 = vmax.f32 %v193, -100.0
    %v213 = vmax.f32 %v195, -100.0
    %v214 = vsub.f32 0.0, %v142
    %v215 = vsub.f32 0.0, %v143
    %v216 = vsub.f32 0.0, %v144
    %v217 = vsub.f32 0.0, %v145
    %v218 = vsub.f32 0.0, %v146
    %v219 = vsub.f32 0.0, %v147
    %v220 = vsub.f32 0.0, %v148
    %v221 = vsub.f32 0.0, %v149
    %v222 = vsub.f32 0.0, %v150
    %v223 = vsub.f32 0.0, %v151
    %v224 = vsub.f32 0.0, %v152
    %v225 = vsub.f32 0.0, %v153
    %v226 = vsub.f32 0.0, %v154
    %v227 = vsub.f32 0.0, %v155
    %v228 = vsub.f32 0.0, %v156
    %v229 = vsub.f32 0.0, %v157
    %v230 = vsub.f32 0.0, %v158
    %v231 = vsub.f32 0.0, %v159
    %v232 = vadd.f32 %v214, 1.0
    %v233 = vlog2.pop %v232
    %v234 = vmul.f32 %v233, 0.6931472
    %v235 = vmul.f32 -0.5, %v214
    %v236 = vadd.f32 %v235, 1.0
    %v237 = vmul.f32 %v236, %v214
    %v238 = vand.u32 2147483647, %v214
    %vm239 = vcmp.lt.f32.partialorder %v238, 0.0004427343
    %v240 = vsel %vm239, %v237, %v234
    %v241 = vadd.f32 %v215, 1.0
    %v242 = vlog2.pop %v241
    %v243 = vmul.f32 %v242, 0.6931472
    %v244 = vmul.f32 -0.5, %v215
    %v245 = vadd.f32 %v244, 1.0
    %v246 = vmul.f32 %v245, %v215
    %v247 = vand.u32 2147483647, %v215
    %vm248 = vcmp.lt.f32.partialorder %v247, 0.0004427343
    %v249 = vsel %vm248, %v246, %v243
    %v250 = vadd.f32 %v216, 1.0
    %v251 = vlog2.pop %v250
    %v252 = vmul.f32 %v251, 0.6931472
    %v253 = vmul.f32 -0.5, %v216
    %v254 = vadd.f32 %v253, 1.0
    %v255 = vmul.f32 %v254, %v216
    %v256 = vand.u32 2147483647, %v216
    %vm257 = vcmp.lt.f32.partialorder %v256, 0.0004427343
    %v258 = vsel %vm257, %v255, %v252
    %v259 = vadd.f32 %v217, 1.0
    %v260 = vlog2.pop %v259
    %v261 = vmul.f32 %v260, 0.6931472
    %v262 = vmul.f32 -0.5, %v217
    %v263 = vadd.f32 %v262, 1.0
    %v264 = vmul.f32 %v263, %v217
    %v265 = vand.u32 2147483647, %v217
    %vm266 = vcmp.lt.f32.partialorder %v265, 0.0004427343
    %v267 = vsel %vm266, %v264, %v261
    %v268 = vadd.f32 %v218, 1.0
    %v269 = vlog2.pop %v268
    %v270 = vmul.f32 %v269, 0.6931472
    %v271 = vmul.f32 -0.5, %v218
    %v272 = vadd.f32 %v271, 1.0
    %v273 = vmul.f32 %v272, %v218
    %v274 = vand.u32 2147483647, %v218
    %vm275 = vcmp.lt.f32.partialorder %v274, 0.0004427343
    %v276 = vsel %vm275, %v273, %v270
    %v277 = vadd.f32 %v219, 1.0
    %v278 = vlog2.pop %v277
    %v279 = vmul.f32 %v278, 0.6931472
    %v280 = vmul.f32 -0.5, %v219
    %v281 = vadd.f32 %v280, 1.0
    %v282 = vmul.f32 %v281, %v219
    %v283 = vand.u32 2147483647, %v219
    %vm284 = vcmp.lt.f32.partialorder %v283, 0.0004427343
    %v285 = vsel %vm284, %v282, %v279
    %v286 = vadd.f32 %v220, 1.0
    %v287 = vlog2.pop %v286
    %v288 = vmul.f32 %v287, 0.6931472
    %v289 = vmul.f32 -0.5, %v220
    %v290 = vadd.f32 %v289, 1.0
    %v291 = vmul.f32 %v290, %v220
    %v292 = vand.u32 2147483647, %v220
    %vm293 = vcmp.lt.f32.partialorder %v292, 0.0004427343
    %v294 = vsel %vm293, %v291, %v288
    %v295 = vadd.f32 %v221, 1.0
    %v296 = vlog2.pop %v295
    %v297 = vmul.f32 %v296, 0.6931472
    %v298 = vmul.f32 -0.5, %v221
    %v299 = vadd.f32 %v298, 1.0
    %v300 = vmul.f32 %v299, %v221
    %v301 = vand.u32 2147483647, %v221
    %vm302 = vcmp.lt.f32.partialorder %v301, 0.0004427343
    %v303 = vsel %vm302, %v300, %v297
    %v304 = vadd.f32 %v222, 1.0
    %v305 = vlog2.pop %v304
    %v306 = vmul.f32 %v305, 0.6931472
    %v307 = vmul.f32 -0.5, %v222
    %v308 = vadd.f32 %v307, 1.0
    %v309 = vmul.f32 %v308, %v222
    %v310 = vand.u32 2147483647, %v222
    %vm311 = vcmp.lt.f32.partialorder %v310, 0.0004427343
    %v312 = vsel %vm311, %v309, %v306
    %v313 = vadd.f32 %v223, 1.0
    %v314 = vlog2.pop %v313
    %v315 = vmul.f32 %v314, 0.6931472
    %v316 = vmul.f32 -0.5, %v223
    %v317 = vadd.f32 %v316, 1.0
    %v318 = vmul.f32 %v317, %v223
    %v319 = vand.u32 2147483647, %v223
    %vm320 = vcmp.lt.f32.partialorder %v319, 0.0004427343
    %v321 = vsel %vm320, %v318, %v315
    %v322 = vadd.f32 %v224, 1.0
    %v323 = vlog2.pop %v322
    %v324 = vmul.f32 %v323, 0.6931472
    %v325 = vmul.f32 -0.5, %v224
    %v326 = vadd.f32 %v325, 1.0
    %v327 = vmul.f32 %v326, %v224
    %v328 = vand.u32 2147483647, %v224
    %vm329 = vcmp.lt.f32.partialorder %v328, 0.0004427343
    %v330 = vsel %vm329, %v327, %v324
    %v331 = vadd.f32 %v225, 1.0
    %v332 = vlog2.pop %v331
    %v333 = vmul.f32 %v332, 0.6931472
    %v334 = vmul.f32 -0.5, %v225
    %v335 = vadd.f32 %v334, 1.0
    %v336 = vmul.f32 %v335, %v225
    %v337 = vand.u32 2147483647, %v225
    %vm338 = vcmp.lt.f32.partialorder %v337, 0.0004427343
    %v339 = vsel %vm338, %v336, %v333
    %v340 = vadd.f32 %v226, 1.0
    %v341 = vlog2.pop %v340
    %v342 = vmul.f32 %v341, 0.6931472
    %v343 = vmul.f32 -0.5, %v226
    %v344 = vadd.f32 %v343, 1.0
    %v345 = vmul.f32 %v344, %v226
    %v346 = vand.u32 2147483647, %v226
    %vm347 = vcmp.lt.f32.partialorder %v346, 0.0004427343
    %v348 = vsel %vm347, %v345, %v342
    %v349 = vadd.f32 %v227, 1.0
    %v350 = vlog2.pop %v349
    %v351 = vmul.f32 %v350, 0.6931472
    %v352 = vmul.f32 -0.5, %v227
    %v353 = vadd.f32 %v352, 1.0
    %v354 = vmul.f32 %v353, %v227
    %v355 = vand.u32 2147483647, %v227
    %vm356 = vcmp.lt.f32.partialorder %v355, 0.0004427343
    %v357 = vsel %vm356, %v354, %v351
    %v358 = vadd.f32 %v228, 1.0
    %v359 = vlog2.pop %v358
    %v360 = vmul.f32 %v359, 0.6931472
    %v361 = vmul.f32 -0.5, %v228
    %v362 = vadd.f32 %v361, 1.0
    %v363 = vmul.f32 %v362, %v228
    %v364 = vand.u32 2147483647, %v228
    %vm365 = vcmp.lt.f32.partialorder %v364, 0.0004427343
    %v366 = vsel %vm365, %v363, %v360
    %v367 = vadd.f32 %v229, 1.0
    %v368 = vlog2.pop %v367
    %v369 = vmul.f32 %v368, 0.6931472
    %v370 = vmul.f32 -0.5, %v229
    %v371 = vadd.f32 %v370, 1.0
    %v372 = vmul.f32 %v371, %v229
    %v373 = vand.u32 2147483647, %v229
    %vm374 = vcmp.lt.f32.partialorder %v373, 0.0004427343
    %v375 = vsel %vm374, %v372, %v369
    %v376 = vadd.f32 %v230, 1.0
    %v377 = vlog2.pop %v376
    %v378 = vmul.f32 %v377, 0.6931472
    %v379 = vmul.f32 -0.5, %v230
    %v380 = vadd.f32 %v379, 1.0
    %v381 = vmul.f32 %v380, %v230
    %v382 = vand.u32 2147483647, %v230
    %vm383 = vcmp.lt.f32.partialorder %v382, 0.0004427343
    %v384 = vsel %vm383, %v381, %v378
    %v385 = vadd.f32 %v231, 1.0
    %v386 = vlog2.pop %v385
    %v387 = vmul.f32 %v386, 0.6931472
    %v388 = vmul.f32 -0.5, %v231
    %v389 = vadd.f32 %v388, 1.0
    %v390 = vmul.f32 %v389, %v231
    %v391 = vand.u32 2147483647, %v231
    %vm392 = vcmp.lt.f32.partialorder %v391, 0.0004427343
    %v393 = vsel %vm392, %v390, %v387
    %v394 = vmax.f32 %v240, -100.0
    %v395 = vmax.f32 %v249, -100.0
    %v396 = vmax.f32 %v258, -100.0
    %v397 = vmax.f32 %v267, -100.0
    %v398 = vmax.f32 %v276, -100.0
    %v399 = vmax.f32 %v285, -100.0
    %v400 = vmax.f32 %v294, -100.0
    %v401 = vmax.f32 %v303, -100.0
    %v402 = vmax.f32 %v312, -100.0
    %v403 = vmax.f32 %v321, -100.0
    %v404 = vmax.f32 %v330, -100.0
    %v405 = vmax.f32 %v339, -100.0
    %v406 = vmax.f32 %v348, -100.0
    %v407 = vmax.f32 %v357, -100.0
    %v408 = vmax.f32 %v366, -100.0
    %v409 = vmax.f32 %v375, -100.0
    %v410 = vmax.f32 %v384, -100.0
    %v411 = vmax.f32 %v393, -100.0
    %430 = vrot.lane.b32.xlu0 %v196, 1
    %v431 = vpop.permute.xlu0 %430
    %432 = vrot.lane.b32.xlu0 %v197, 1
    %v433 = vpop.permute.xlu0 %432
    %434 = vrot.lane.b32.xlu0 %v198, 1
    %v435 = vpop.permute.xlu0 %434
    %436 = vrot.lane.b32.xlu0 %v199, 1
    %v437 = vpop.permute.xlu0 %436
    %438 = vrot.lane.b32.xlu0 %v200, 1
    %v439 = vpop.permute.xlu0 %438
    %440 = vrot.lane.b32.xlu0 %v201, 1
    %v441 = vpop.permute.xlu0 %440
    %442 = vrot.lane.b32.xlu0 %v202, 1
    %v443 = vpop.permute.xlu0 %442
    %444 = vrot.lane.b32.xlu0 %v203, 1
    %v445 = vpop.permute.xlu0 %444
    %446 = vrot.lane.b32.xlu0 %v204, 1
    %v447 = vpop.permute.xlu0 %446
    %448 = vrot.lane.b32.xlu0 %v205, 1
    %v449 = vpop.permute.xlu0 %448
    %450 = vrot.lane.b32.xlu0 %v206, 1
    %v451 = vpop.permute.xlu0 %450
    %452 = vrot.lane.b32.xlu0 %v207, 1
    %v453 = vpop.permute.xlu0 %452
    %454 = vrot.lane.b32.xlu0 %v208, 1
    %v455 = vpop.permute.xlu0 %454
    %456 = vrot.lane.b32.xlu0 %v209, 1
    %v457 = vpop.permute.xlu0 %456
    %458 = vrot.lane.b32.xlu0 %v210, 1
    %v459 = vpop.permute.xlu0 %458
    %460 = vrot.lane.b32.xlu0 %v211, 1
    %v461 = vpop.permute.xlu0 %460
    %462 = vrot.lane.b32.xlu0 %v212, 1
    %v463 = vpop.permute.xlu0 %462
    %464 = vrot.lane.b32.xlu0 %v213, 1
    %v465 = vpop.permute.xlu0 %464
    %v484 = vmul.f32 %v142, %v431
    %v485 = vmul.f32 %v143, %v433
    %v486 = vmul.f32 %v144, %v435
    %v487 = vmul.f32 %v145, %v437
    %v488 = vmul.f32 %v146, %v439
    %v489 = vmul.f32 %v147, %v441
    %v490 = vmul.f32 %v148, %v443
    %v491 = vmul.f32 %v149, %v445
    %v492 = vmul.f32 %v150, %v447
    %v493 = vmul.f32 %v151, %v449
    %v494 = vmul.f32 %v152, %v451
    %v495 = vmul.f32 %v153, %v453
    %v496 = vmul.f32 %v154, %v455
    %v497 = vmul.f32 %v155, %v457
    %v498 = vmul.f32 %v156, %v459
    %v499 = vmul.f32 %v157, %v461
    %v500 = vmul.f32 %v158, %v463
    %v501 = vmul.f32 %v159, %v465
    %v502 = vsub.f32 1.0, %v142
    %v503 = vsub.f32 1.0, %v143
    %v504 = vsub.f32 1.0, %v144
    %v505 = vsub.f32 1.0, %v145
    %v506 = vsub.f32 1.0, %v146
    %v507 = vsub.f32 1.0, %v147
    %v508 = vsub.f32 1.0, %v148
    %v509 = vsub.f32 1.0, %v149
    %v510 = vsub.f32 1.0, %v150
    %v511 = vsub.f32 1.0, %v151
    %v512 = vsub.f32 1.0, %v152
    %v513 = vsub.f32 1.0, %v153
    %v514 = vsub.f32 1.0, %v154
    %v515 = vsub.f32 1.0, %v155
    %v516 = vsub.f32 1.0, %v156
    %v517 = vsub.f32 1.0, %v157
    %v518 = vsub.f32 1.0, %v158
    %v519 = vsub.f32 1.0, %v159
    %538 = vrot.lane.b32.xlu0 %v394, 1
    %v539 = vpop.permute.xlu0 %538
    %540 = vrot.lane.b32.xlu0 %v395, 1
    %v541 = vpop.permute.xlu0 %540
    %542 = vrot.lane.b32.xlu0 %v396, 1
    %v543 = vpop.permute.xlu0 %542
    %544 = vrot.lane.b32.xlu0 %v397, 1
    %v545 = vpop.permute.xlu0 %544
    %546 = vrot.lane.b32.xlu0 %v398, 1
    %v547 = vpop.permute.xlu0 %546
    %548 = vrot.lane.b32.xlu0 %v399, 1
    %v549 = vpop.permute.xlu0 %548
    %550 = vrot.lane.b32.xlu0 %v400, 1
    %v551 = vpop.permute.xlu0 %550
    %552 = vrot.lane.b32.xlu0 %v401, 1
    %v553 = vpop.permute.xlu0 %552
    %554 = vrot.lane.b32.xlu0 %v402, 1
    %v555 = vpop.permute.xlu0 %554
    %556 = vrot.lane.b32.xlu0 %v403, 1
    %v557 = vpop.permute.xlu0 %556
    %558 = vrot.lane.b32.xlu0 %v404, 1
    %v559 = vpop.permute.xlu0 %558
    %560 = vrot.lane.b32.xlu0 %v405, 1
    %v561 = vpop.permute.xlu0 %560
    %562 = vrot.lane.b32.xlu0 %v406, 1
    %v563 = vpop.permute.xlu0 %562
    %564 = vrot.lane.b32.xlu0 %v407, 1
    %v565 = vpop.permute.xlu0 %564
    %566 = vrot.lane.b32.xlu0 %v408, 1
    %v567 = vpop.permute.xlu0 %566
    %568 = vrot.lane.b32.xlu0 %v409, 1
    %v569 = vpop.permute.xlu0 %568
    %570 = vrot.lane.b32.xlu0 %v410, 1
    %v571 = vpop.permute.xlu0 %570
    %572 = vrot.lane.b32.xlu0 %v411, 1
    %v573 = vpop.permute.xlu0 %572
    %v592 = vmul.f32 %v502, %v539
    %v593 = vmul.f32 %v503, %v541
    %v594 = vmul.f32 %v504, %v543
    %v595 = vmul.f32 %v505, %v545
    %v596 = vmul.f32 %v506, %v547
    %v597 = vmul.f32 %v507, %v549
    %v598 = vmul.f32 %v508, %v551
    %v599 = vmul.f32 %v509, %v553
    %v600 = vmul.f32 %v510, %v555
    %v601 = vmul.f32 %v511, %v557
    %v602 = vmul.f32 %v512, %v559
    %v603 = vmul.f32 %v513, %v561
    %v604 = vmul.f32 %v514, %v563
    %v605 = vmul.f32 %v515, %v565
    %v606 = vmul.f32 %v516, %v567
    %v607 = vmul.f32 %v517, %v569
    %v608 = vmul.f32 %v518, %v571
    %v609 = vmul.f32 %v519, %v573
    %v610 = vadd.f32 %v484, %v592
    %v611 = vadd.f32 %v485, %v593
    %v612 = vadd.f32 %v486, %v594
    %v613 = vadd.f32 %v487, %v595
    %v614 = vadd.f32 %v488, %v596
    %v615 = vadd.f32 %v489, %v597
    %v616 = vadd.f32 %v490, %v598
    %v617 = vadd.f32 %v491, %v599
    %v618 = vadd.f32 %v492, %v600
    %v619 = vadd.f32 %v493, %v601
    %v620 = vadd.f32 %v494, %v602
    %v621 = vadd.f32 %v495, %v603
    %v622 = vadd.f32 %v496, %v604
    %v623 = vadd.f32 %v497, %v605
    %v624 = vadd.f32 %v498, %v606
    %v625 = vadd.f32 %v499, %v607
    %v626 = vadd.f32 %v500, %v608
    %v627 = vadd.f32 %v501, %v609
    %v628 = vsub.f32 0.0, %v610
    %v629 = vsub.f32 0.0, %v611
    %v630 = vsub.f32 0.0, %v612
    %v631 = vsub.f32 0.0, %v613
    %v632 = vsub.f32 0.0, %v614
    %v633 = vsub.f32 0.0, %v615
    %v634 = vsub.f32 0.0, %v616
    %v635 = vsub.f32 0.0, %v617
    %v636 = vsub.f32 0.0, %v618
    %v637 = vsub.f32 0.0, %v619
    %v638 = vsub.f32 0.0, %v620
    %v639 = vsub.f32 0.0, %v621
    %v640 = vsub.f32 0.0, %v622
    %v641 = vsub.f32 0.0, %v623
    %v642 = vsub.f32 0.0, %v624
    %v643 = vsub.f32 0.0, %v625
    %v644 = vsub.f32 0.0, %v626
    %v645 = vsub.f32 0.0, %v627
    %647 = vset.pattern.permute.xlu0 1
    %648 = vperm.xlu0 %647, %v142
    %v649 = vpop.permute.xlu0 %648
    %652 = vset.pattern.permute.xlu0 1
    %653 = vperm.xlu0 %652, %v143
    %v654 = vpop.permute.xlu0 %653
    %657 = vset.pattern.permute.xlu0 1
    %658 = vperm.xlu0 %657, %v144
    %v659 = vpop.permute.xlu0 %658
    %662 = vset.pattern.permute.xlu0 1
    %663 = vperm.xlu0 %662, %v145
    %v664 = vpop.permute.xlu0 %663
    %667 = vset.pattern.permute.xlu0 1
    %668 = vperm.xlu0 %667, %v146
    %v669 = vpop.permute.xlu0 %668
    %672 = vset.pattern.permute.xlu0 1
    %673 = vperm.xlu0 %672, %v147
    %v674 = vpop.permute.xlu0 %673
    %677 = vset.pattern.permute.xlu0 1
    %678 = vperm.xlu0 %677, %v148
    %v679 = vpop.permute.xlu0 %678
    %682 = vset.pattern.permute.xlu0 1
    %683 = vperm.xlu0 %682, %v149
    %v684 = vpop.permute.xlu0 %683
    %687 = vset.pattern.permute.xlu0 1
    %688 = vperm.xlu0 %687, %v150
    %v689 = vpop.permute.xlu0 %688
    %692 = vset.pattern.permute.xlu0 1
    %693 = vperm.xlu0 %692, %v151
    %v694 = vpop.permute.xlu0 %693
    %697 = vset.pattern.permute.xlu0 1
    %698 = vperm.xlu0 %697, %v152
    %v699 = vpop.permute.xlu0 %698
    %702 = vset.pattern.permute.xlu0 1
    %703 = vperm.xlu0 %702, %v153
    %v704 = vpop.permute.xlu0 %703
    %707 = vset.pattern.permute.xlu0 1
    %708 = vperm.xlu0 %707, %v154
    %v709 = vpop.permute.xlu0 %708
    %712 = vset.pattern.permute.xlu0 1
    %713 = vperm.xlu0 %712, %v155
    %v714 = vpop.permute.xlu0 %713
    %717 = vset.pattern.permute.xlu0 1
    %718 = vperm.xlu0 %717, %v156
    %v719 = vpop.permute.xlu0 %718
    %722 = vset.pattern.permute.xlu0 1
    %723 = vperm.xlu0 %722, %v157
    %v724 = vpop.permute.xlu0 %723
    %727 = vset.pattern.permute.xlu0 1
    %728 = vperm.xlu0 %727, %v158
    %v729 = vpop.permute.xlu0 %728
    %732 = vset.pattern.permute.xlu0 1
    %733 = vperm.xlu0 %732, %v159
    %v734 = vpop.permute.xlu0 %733
    %v736 = vmul.f32 %v142, %v649
    %v737 = vmul.f32 %v143, %v654
    %v738 = vmul.f32 %v144, %v659
    %v739 = vmul.f32 %v145, %v664
    %v740 = vmul.f32 %v146, %v669
    %v741 = vmul.f32 %v147, %v674
    %v742 = vmul.f32 %v148, %v679
    %v743 = vmul.f32 %v149, %v684
    %v744 = vmul.f32 %v150, %v689
    %v745 = vmul.f32 %v151, %v694
    %v746 = vmul.f32 %v152, %v699
    %v747 = vmul.f32 %v153, %v704
    %v748 = vmul.f32 %v154, %v709
    %v749 = vmul.f32 %v155, %v714
    %v750 = vmul.f32 %v156, %v719
    %v751 = vmul.f32 %v157, %v724
    %v752 = vmul.f32 %v158, %v729
    %v753 = vmul.f32 %v159, %v734
    %754 = vrot.lane.b32.xlu0 %v142, 125
    %v755 = vpop.permute.xlu0 %754
    %756 = vrot.lane.b32.xlu0 %v143, 125
    %v757 = vpop.permute.xlu0 %756
    %758 = vrot.lane.b32.xlu0 %v144, 125
    %v759 = vpop.permute.xlu0 %758
    %760 = vrot.lane.b32.xlu0 %v145, 125
    %v761 = vpop.permute.xlu0 %760
    %762 = vrot.lane.b32.xlu0 %v146, 125
    %v763 = vpop.permute.xlu0 %762
    %764 = vrot.lane.b32.xlu0 %v147, 125
    %v765 = vpop.permute.xlu0 %764
    %766 = vrot.lane.b32.xlu0 %v148, 125
    %v767 = vpop.permute.xlu0 %766
    %768 = vrot.lane.b32.xlu0 %v149, 125
    %v769 = vpop.permute.xlu0 %768
    %770 = vrot.lane.b32.xlu0 %v150, 125
    %v771 = vpop.permute.xlu0 %770
    %772 = vrot.lane.b32.xlu0 %v151, 125
    %v773 = vpop.permute.xlu0 %772
    %774 = vrot.lane.b32.xlu0 %v152, 125
    %v775 = vpop.permute.xlu0 %774
    %776 = vrot.lane.b32.xlu0 %v153, 125
    %v777 = vpop.permute.xlu0 %776
    %778 = vrot.lane.b32.xlu0 %v154, 125
    %v779 = vpop.permute.xlu0 %778
    %780 = vrot.lane.b32.xlu0 %v155, 125
    %v781 = vpop.permute.xlu0 %780
    %782 = vrot.lane.b32.xlu0 %v156, 125
    %v783 = vpop.permute.xlu0 %782
    %784 = vrot.lane.b32.xlu0 %v157, 125
    %v785 = vpop.permute.xlu0 %784
    %786 = vrot.lane.b32.xlu0 %v158, 125
    %v787 = vpop.permute.xlu0 %786
    %788 = vrot.lane.b32.xlu0 %v159, 125
    %v789 = vpop.permute.xlu0 %788
    %v808 = vmul.f32 %v736, %v755
    %v809 = vmul.f32 %v737, %v757
    %v810 = vmul.f32 %v738, %v759
    %v811 = vmul.f32 %v739, %v761
    %v812 = vmul.f32 %v740, %v763
    %v813 = vmul.f32 %v741, %v765
    %v814 = vmul.f32 %v742, %v767
    %v815 = vmul.f32 %v743, %v769
    %v816 = vmul.f32 %v744, %v771
    %v817 = vmul.f32 %v745, %v773
    %v818 = vmul.f32 %v746, %v775
    %v819 = vmul.f32 %v747, %v777
    %v820 = vmul.f32 %v748, %v779
    %v821 = vmul.f32 %v749, %v781
    %v822 = vmul.f32 %v750, %v783
    %v823 = vmul.f32 %v751, %v785
    %v824 = vmul.f32 %v752, %v787
    %v825 = vmul.f32 %v753, %v789
    %844 = vrot.lane.b32.xlu0 %v808, 124
    %v845 = vpop.permute.xlu0 %844
    %846 = vrot.lane.b32.xlu0 %v809, 124
    %v847 = vpop.permute.xlu0 %846
    %848 = vrot.lane.b32.xlu0 %v810, 124
    %v849 = vpop.permute.xlu0 %848
    %850 = vrot.lane.b32.xlu0 %v811, 124
    %v851 = vpop.permute.xlu0 %850
    %852 = vrot.lane.b32.xlu0 %v812, 124
    %v853 = vpop.permute.xlu0 %852
    %854 = vrot.lane.b32.xlu0 %v813, 124
    %v855 = vpop.permute.xlu0 %854
    %856 = vrot.lane.b32.xlu0 %v814, 124
    %v857 = vpop.permute.xlu0 %856
    %858 = vrot.lane.b32.xlu0 %v815, 124
    %v859 = vpop.permute.xlu0 %858
    %860 = vrot.lane.b32.xlu0 %v816, 124
    %v861 = vpop.permute.xlu0 %860
    %862 = vrot.lane.b32.xlu0 %v817, 124
    %v863 = vpop.permute.xlu0 %862
    %864 = vrot.lane.b32.xlu0 %v818, 124
    %v865 = vpop.permute.xlu0 %864
    %866 = vrot.lane.b32.xlu0 %v819, 124
    %v867 = vpop.permute.xlu0 %866
    %868 = vrot.lane.b32.xlu0 %v820, 124
    %v869 = vpop.permute.xlu0 %868
    %870 = vrot.lane.b32.xlu0 %v821, 124
    %v871 = vpop.permute.xlu0 %870
    %872 = vrot.lane.b32.xlu0 %v822, 124
    %v873 = vpop.permute.xlu0 %872
    %874 = vrot.lane.b32.xlu0 %v823, 124
    %v875 = vpop.permute.xlu0 %874
    %876 = vrot.lane.b32.xlu0 %v824, 124
    %v877 = vpop.permute.xlu0 %876
    %878 = vrot.lane.b32.xlu0 %v825, 124
    %v879 = vpop.permute.xlu0 %878
    %vm898 = vcmask 23552
    %v899 = vsel %vm898, %v845, 0.0
    %900 = vadd.xlane.f32.xlu0 %v899
    %v901 = vpop.xlane.xlu0 %900
    %v902 = vsel %vm898, %v847, 0.0
    %903 = vadd.xlane.f32.xlu0 %v902
    %v904 = vpop.xlane.xlu0 %903
    %v905 = vsel %vm898, %v849, 0.0
    %906 = vadd.xlane.f32.xlu0 %v905
    %v907 = vpop.xlane.xlu0 %906
    %v908 = vsel %vm898, %v851, 0.0
    %909 = vadd.xlane.f32.xlu0 %v908
    %v910 = vpop.xlane.xlu0 %909
    %v911 = vsel %vm898, %v853, 0.0
    %912 = vadd.xlane.f32.xlu0 %v911
    %v913 = vpop.xlane.xlu0 %912
    %v914 = vsel %vm898, %v855, 0.0
    %915 = vadd.xlane.f32.xlu0 %v914
    %v916 = vpop.xlane.xlu0 %915
    %v917 = vsel %vm898, %v857, 0.0
    %918 = vadd.xlane.f32.xlu0 %v917
    %v919 = vpop.xlane.xlu0 %918
    %v920 = vsel %vm898, %v859, 0.0
    %921 = vadd.xlane.f32.xlu0 %v920
    %v922 = vpop.xlane.xlu0 %921
    %v923 = vsel %vm898, %v861, 0.0
    %924 = vadd.xlane.f32.xlu0 %v923
    %v925 = vpop.xlane.xlu0 %924
    %v926 = vsel %vm898, %v863, 0.0
    %927 = vadd.xlane.f32.xlu0 %v926
    %v928 = vpop.xlane.xlu0 %927
    %v929 = vsel %vm898, %v865, 0.0
    %930 = vadd.xlane.f32.xlu0 %v929
    %v931 = vpop.xlane.xlu0 %930
    %v932 = vsel %vm898, %v867, 0.0
    %933 = vadd.xlane.f32.xlu0 %v932
    %v934 = vpop.xlane.xlu0 %933
    %v935 = vsel %vm898, %v869, 0.0
    %936 = vadd.xlane.f32.xlu0 %v935
    %v937 = vpop.xlane.xlu0 %936
    %v938 = vsel %vm898, %v871, 0.0
    %939 = vadd.xlane.f32.xlu0 %v938
    %v940 = vpop.xlane.xlu0 %939
    %v941 = vsel %vm898, %v873, 0.0
    %942 = vadd.xlane.f32.xlu0 %v941
    %v943 = vpop.xlane.xlu0 %942
    %v944 = vsel %vm898, %v875, 0.0
    %945 = vadd.xlane.f32.xlu0 %v944
    %v946 = vpop.xlane.xlu0 %945
    %v947 = vsel %vm898, %v877, 0.0
    %948 = vadd.xlane.f32.xlu0 %v947
    %v949 = vpop.xlane.xlu0 %948
    %v950 = vsel %vm898, %v879, 0.0
    %951 = vadd.xlane.f32.xlu0 %v950
    %v952 = vpop.xlane.xlu0 %951
    %v953 = vand.u32 2147483647, %v901
    %v954 = vand.u32 2147483647, %v904
    %v955 = vand.u32 2147483647, %v907
    %v956 = vand.u32 2147483647, %v910
    %v957 = vand.u32 2147483647, %v913
    %v958 = vand.u32 2147483647, %v916
    %v959 = vand.u32 2147483647, %v919
    %v960 = vand.u32 2147483647, %v922
    %v961 = vand.u32 2147483647, %v925
    %v962 = vand.u32 2147483647, %v928
    %v963 = vand.u32 2147483647, %v931
    %v964 = vand.u32 2147483647, %v934
    %v965 = vand.u32 2147483647, %v937
    %v966 = vand.u32 2147483647, %v940
    %v967 = vand.u32 2147483647, %v943
    %v968 = vand.u32 2147483647, %v946
    %v969 = vand.u32 2147483647, %v949
    %v970 = vand.u32 2147483647, %v952
    %v971 = vsub.f32 0.0, %v953
    %v972 = vsub.f32 0.0, %v954
    %v973 = vsub.f32 0.0, %v955
    %v974 = vsub.f32 0.0, %v956
    %v975 = vsub.f32 0.0, %v957
    %v976 = vsub.f32 0.0, %v958
    %v977 = vsub.f32 0.0, %v959
    %v978 = vsub.f32 0.0, %v960
    %v979 = vsub.f32 0.0, %v961
    %v980 = vsub.f32 0.0, %v962
    %v981 = vsub.f32 0.0, %v963
    %v982 = vsub.f32 0.0, %v964
    %v983 = vsub.f32 0.0, %v965
    %v984 = vsub.f32 0.0, %v966
    %v985 = vsub.f32 0.0, %v967
    %v986 = vsub.f32 0.0, %v968
    %v987 = vsub.f32 0.0, %v969
    %v988 = vsub.f32 0.0, %v970
    %989 = vset.pattern.permute.xlu0 3
    %990 = vperm.xlu0 %989, %v142
    %v991 = vpop.permute.xlu0 %990
    %993 = vset.pattern.permute.xlu0 3
    %994 = vperm.xlu0 %993, %v143
    %v995 = vpop.permute.xlu0 %994
    %997 = vset.pattern.permute.xlu0 3
    %998 = vperm.xlu0 %997, %v144
    %v999 = vpop.permute.xlu0 %998
    %1001 = vset.pattern.permute.xlu0 3
    %1002 = vperm.xlu0 %1001, %v145
    %v1003 = vpop.permute.xlu0 %1002
    %1005 = vset.pattern.permute.xlu0 3
    %1006 = vperm.xlu0 %1005, %v146
    %v1007 = vpop.permute.xlu0 %1006
    %1009 = vset.pattern.permute.xlu0 3
    %1010 = vperm.xlu0 %1009, %v147
    %v1011 = vpop.permute.xlu0 %1010
    %1013 = vset.pattern.permute.xlu0 3
    %1014 = vperm.xlu0 %1013, %v148
    %v1015 = vpop.permute.xlu0 %1014
    %1017 = vset.pattern.permute.xlu0 3
    %1018 = vperm.xlu0 %1017, %v149
    %v1019 = vpop.permute.xlu0 %1018
    %1021 = vset.pattern.permute.xlu0 3
    %1022 = vperm.xlu0 %1021, %v150
    %v1023 = vpop.permute.xlu0 %1022
    %1025 = vset.pattern.permute.xlu0 3
    %1026 = vperm.xlu0 %1025, %v151
    %v1027 = vpop.permute.xlu0 %1026
    %1029 = vset.pattern.permute.xlu0 3
    %1030 = vperm.xlu0 %1029, %v152
    %v1031 = vpop.permute.xlu0 %1030
    %1033 = vset.pattern.permute.xlu0 3
    %1034 = vperm.xlu0 %1033, %v153
    %v1035 = vpop.permute.xlu0 %1034
    %1037 = vset.pattern.permute.xlu0 3
    %1038 = vperm.xlu0 %1037, %v154
    %v1039 = vpop.permute.xlu0 %1038
    %1041 = vset.pattern.permute.xlu0 3
    %1042 = vperm.xlu0 %1041, %v155
    %v1043 = vpop.permute.xlu0 %1042
    %1045 = vset.pattern.permute.xlu0 3
    %1046 = vperm.xlu0 %1045, %v156
    %v1047 = vpop.permute.xlu0 %1046
    %1049 = vset.pattern.permute.xlu0 3
    %1050 = vperm.xlu0 %1049, %v157
    %v1051 = vpop.permute.xlu0 %1050
    %1053 = vset.pattern.permute.xlu0 3
    %1054 = vperm.xlu0 %1053, %v158
    %v1055 = vpop.permute.xlu0 %1054
    %1057 = vset.pattern.permute.xlu0 3
    %1058 = vperm.xlu0 %1057, %v159
    %v1059 = vpop.permute.xlu0 %1058
    %v1061 = vmul.f32 %v142, %v991
    %v1062 = vmul.f32 %v143, %v995
    %v1063 = vmul.f32 %v144, %v999
    %v1064 = vmul.f32 %v145, %v1003
    %v1065 = vmul.f32 %v146, %v1007
    %v1066 = vmul.f32 %v147, %v1011
    %v1067 = vmul.f32 %v148, %v1015
    %v1068 = vmul.f32 %v149, %v1019
    %v1069 = vmul.f32 %v150, %v1023
    %v1070 = vmul.f32 %v151, %v1027
    %v1071 = vmul.f32 %v152, %v1031
    %v1072 = vmul.f32 %v153, %v1035
    %v1073 = vmul.f32 %v154, %v1039
    %v1074 = vmul.f32 %v155, %v1043
    %v1075 = vmul.f32 %v156, %v1047
    %v1076 = vmul.f32 %v157, %v1051
    %v1077 = vmul.f32 %v158, %v1055
    %v1078 = vmul.f32 %v159, %v1059
    %v1079 = vmul.f32 %v1061, %v755
    %v1080 = vmul.f32 %v1062, %v757
    %v1081 = vmul.f32 %v1063, %v759
    %v1082 = vmul.f32 %v1064, %v761
    %v1083 = vmul.f32 %v1065, %v763
    %v1084 = vmul.f32 %v1066, %v765
    %v1085 = vmul.f32 %v1067, %v767
    %v1086 = vmul.f32 %v1068, %v769
    %v1087 = vmul.f32 %v1069, %v771
    %v1088 = vmul.f32 %v1070, %v773
    %v1089 = vmul.f32 %v1071, %v775
    %v1090 = vmul.f32 %v1072, %v777
    %v1091 = vmul.f32 %v1073, %v779
    %v1092 = vmul.f32 %v1074, %v781
    %v1093 = vmul.f32 %v1075, %v783
    %v1094 = vmul.f32 %v1076, %v785
    %v1095 = vmul.f32 %v1077, %v787
    %v1096 = vmul.f32 %v1078, %v789
    %1115 = vrot.lane.b32.xlu0 %v1079, 118
    %v1116 = vpop.permute.xlu0 %1115
    %1117 = vrot.lane.b32.xlu0 %v1080, 118
    %v1118 = vpop.permute.xlu0 %1117
    %1119 = vrot.lane.b32.xlu0 %v1081, 118
    %v1120 = vpop.permute.xlu0 %1119
    %1121 = vrot.lane.b32.xlu0 %v1082, 118
    %v1122 = vpop.permute.xlu0 %1121
    %1123 = vrot.lane.b32.xlu0 %v1083, 118
    %v1124 = vpop.permute.xlu0 %1123
    %1125 = vrot.lane.b32.xlu0 %v1084, 118
    %v1126 = vpop.permute.xlu0 %1125
    %1127 = vrot.lane.b32.xlu0 %v1085, 118
    %v1128 = vpop.permute.xlu0 %1127
    %1129 = vrot.lane.b32.xlu0 %v1086, 118
    %v1130 = vpop.permute.xlu0 %1129
    %1131 = vrot.lane.b32.xlu0 %v1087, 118
    %v1132 = vpop.permute.xlu0 %1131
    %1133 = vrot.lane.b32.xlu0 %v1088, 118
    %v1134 = vpop.permute.xlu0 %1133
    %1135 = vrot.lane.b32.xlu0 %v1089, 118
    %v1136 = vpop.permute.xlu0 %1135
    %1137 = vrot.lane.b32.xlu0 %v1090, 118
    %v1138 = vpop.permute.xlu0 %1137
    %1139 = vrot.lane.b32.xlu0 %v1091, 118
    %v1140 = vpop.permute.xlu0 %1139
    %1141 = vrot.lane.b32.xlu0 %v1092, 118
    %v1142 = vpop.permute.xlu0 %1141
    %1143 = vrot.lane.b32.xlu0 %v1093, 118
    %v1144 = vpop.permute.xlu0 %1143
    %1145 = vrot.lane.b32.xlu0 %v1094, 118
    %v1146 = vpop.permute.xlu0 %1145
    %1147 = vrot.lane.b32.xlu0 %v1095, 118
    %v1148 = vpop.permute.xlu0 %1147
    %1149 = vrot.lane.b32.xlu0 %v1096, 118
    %v1150 = vpop.permute.xlu0 %1149
    %v1169 = vsel %vm898, %v1116, 0.0
    %1170 = vadd.xlane.f32.xlu0 %v1169
    %v1171 = vpop.xlane.xlu0 %1170
    %v1172 = vsel %vm898, %v1118, 0.0
    %1173 = vadd.xlane.f32.xlu0 %v1172
    %v1174 = vpop.xlane.xlu0 %1173
    %v1175 = vsel %vm898, %v1120, 0.0
    %1176 = vadd.xlane.f32.xlu0 %v1175
    %v1177 = vpop.xlane.xlu0 %1176
    %v1178 = vsel %vm898, %v1122, 0.0
    %1179 = vadd.xlane.f32.xlu0 %v1178
    %v1180 = vpop.xlane.xlu0 %1179
    %v1181 = vsel %vm898, %v1124, 0.0
    %1182 = vadd.xlane.f32.xlu0 %v1181
    %v1183 = vpop.xlane.xlu0 %1182
    %v1184 = vsel %vm898, %v1126, 0.0
    %1185 = vadd.xlane.f32.xlu0 %v1184
    %v1186 = vpop.xlane.xlu0 %1185
    %v1187 = vsel %vm898, %v1128, 0.0
    %1188 = vadd.xlane.f32.xlu0 %v1187
    %v1189 = vpop.xlane.xlu0 %1188
    %v1190 = vsel %vm898, %v1130, 0.0
    %1191 = vadd.xlane.f32.xlu0 %v1190
    %v1192 = vpop.xlane.xlu0 %1191
    %v1193 = vsel %vm898, %v1132, 0.0
    %1194 = vadd.xlane.f32.xlu0 %v1193
    %v1195 = vpop.xlane.xlu0 %1194
    %v1196 = vsel %vm898, %v1134, 0.0
    %1197 = vadd.xlane.f32.xlu0 %v1196
    %v1198 = vpop.xlane.xlu0 %1197
    %v1199 = vsel %vm898, %v1136, 0.0
    %1200 = vadd.xlane.f32.xlu0 %v1199
    %v1201 = vpop.xlane.xlu0 %1200
    %v1202 = vsel %vm898, %v1138, 0.0
    %1203 = vadd.xlane.f32.xlu0 %v1202
    %v1204 = vpop.xlane.xlu0 %1203
    %v1205 = vsel %vm898, %v1140, 0.0
    %1206 = vadd.xlane.f32.xlu0 %v1205
    %v1207 = vpop.xlane.xlu0 %1206
    %v1208 = vsel %vm898, %v1142, 0.0
    %1209 = vadd.xlane.f32.xlu0 %v1208
    %v1210 = vpop.xlane.xlu0 %1209
    %v1211 = vsel %vm898, %v1144, 0.0
    %1212 = vadd.xlane.f32.xlu0 %v1211
    %v1213 = vpop.xlane.xlu0 %1212
    %v1214 = vsel %vm898, %v1146, 0.0
    %1215 = vadd.xlane.f32.xlu0 %v1214
    %v1216 = vpop.xlane.xlu0 %1215
    %v1217 = vsel %vm898, %v1148, 0.0
    %1218 = vadd.xlane.f32.xlu0 %v1217
    %v1219 = vpop.xlane.xlu0 %1218
    %v1220 = vsel %vm898, %v1150, 0.0
    %1221 = vadd.xlane.f32.xlu0 %v1220
    %v1222 = vpop.xlane.xlu0 %1221
    %v1223 = vand.u32 2147483647, %v1171
    %v1224 = vand.u32 2147483647, %v1174
    %v1225 = vand.u32 2147483647, %v1177
    %v1226 = vand.u32 2147483647, %v1180
    %v1227 = vand.u32 2147483647, %v1183
    %v1228 = vand.u32 2147483647, %v1186
    %v1229 = vand.u32 2147483647, %v1189
    %v1230 = vand.u32 2147483647, %v1192
    %v1231 = vand.u32 2147483647, %v1195
    %v1232 = vand.u32 2147483647, %v1198
    %v1233 = vand.u32 2147483647, %v1201
    %v1234 = vand.u32 2147483647, %v1204
    %v1235 = vand.u32 2147483647, %v1207
    %v1236 = vand.u32 2147483647, %v1210
    %v1237 = vand.u32 2147483647, %v1213
    %v1238 = vand.u32 2147483647, %v1216
    %v1239 = vand.u32 2147483647, %v1219
    %v1240 = vand.u32 2147483647, %v1222
    %v1241 = vsub.f32 0.0, %v1223
    %v1242 = vsub.f32 0.0, %v1224
    %v1243 = vsub.f32 0.0, %v1225
    %v1244 = vsub.f32 0.0, %v1226
    %v1245 = vsub.f32 0.0, %v1227
    %v1246 = vsub.f32 0.0, %v1228
    %v1247 = vsub.f32 0.0, %v1229
    %v1248 = vsub.f32 0.0, %v1230
    %v1249 = vsub.f32 0.0, %v1231
    %v1250 = vsub.f32 0.0, %v1232
    %v1251 = vsub.f32 0.0, %v1233
    %v1252 = vsub.f32 0.0, %v1234
    %v1253 = vsub.f32 0.0, %v1235
    %v1254 = vsub.f32 0.0, %v1236
    %v1255 = vsub.f32 0.0, %v1237
    %v1256 = vsub.f32 0.0, %v1238
    %v1257 = vsub.f32 0.0, %v1239
    %v1258 = vsub.f32 0.0, %v1240
    %1277 = vrot.lane.b32.xlu0 %v1061, 122
    %v1278 = vpop.permute.xlu0 %1277
    %1279 = vrot.lane.b32.xlu0 %v1062, 122
    %v1280 = vpop.permute.xlu0 %1279
    %1281 = vrot.lane.b32.xlu0 %v1063, 122
    %v1282 = vpop.permute.xlu0 %1281
    %1283 = vrot.lane.b32.xlu0 %v1064, 122
    %v1284 = vpop.permute.xlu0 %1283
    %1285 = vrot.lane.b32.xlu0 %v1065, 122
    %v1286 = vpop.permute.xlu0 %1285
    %1287 = vrot.lane.b32.xlu0 %v1066, 122
    %v1288 = vpop.permute.xlu0 %1287
    %1289 = vrot.lane.b32.xlu0 %v1067, 122
    %v1290 = vpop.permute.xlu0 %1289
    %1291 = vrot.lane.b32.xlu0 %v1068, 122
    %v1292 = vpop.permute.xlu0 %1291
    %1293 = vrot.lane.b32.xlu0 %v1069, 122
    %v1294 = vpop.permute.xlu0 %1293
    %1295 = vrot.lane.b32.xlu0 %v1070, 122
    %v1296 = vpop.permute.xlu0 %1295
    %1297 = vrot.lane.b32.xlu0 %v1071, 122
    %v1298 = vpop.permute.xlu0 %1297
    %1299 = vrot.lane.b32.xlu0 %v1072, 122
    %v1300 = vpop.permute.xlu0 %1299
    %1301 = vrot.lane.b32.xlu0 %v1073, 122
    %v1302 = vpop.permute.xlu0 %1301
    %1303 = vrot.lane.b32.xlu0 %v1074, 122
    %v1304 = vpop.permute.xlu0 %1303
    %1305 = vrot.lane.b32.xlu0 %v1075, 122
    %v1306 = vpop.permute.xlu0 %1305
    %1307 = vrot.lane.b32.xlu0 %v1076, 122
    %v1308 = vpop.permute.xlu0 %1307
    %1309 = vrot.lane.b32.xlu0 %v1077, 122
    %v1310 = vpop.permute.xlu0 %1309
    %1311 = vrot.lane.b32.xlu0 %v1078, 122
    %v1312 = vpop.permute.xlu0 %1311
    %v1331 = vmul.f32 %v142, %v1278
    %v1332 = vmul.f32 %v143, %v1280
    %v1333 = vmul.f32 %v144, %v1282
    %v1334 = vmul.f32 %v145, %v1284
    %v1335 = vmul.f32 %v146, %v1286
    %v1336 = vmul.f32 %v147, %v1288
    %v1337 = vmul.f32 %v148, %v1290
    %v1338 = vmul.f32 %v149, %v1292
    %v1339 = vmul.f32 %v150, %v1294
    %v1340 = vmul.f32 %v151, %v1296
    %v1341 = vmul.f32 %v152, %v1298
    %v1342 = vmul.f32 %v153, %v1300
    %v1343 = vmul.f32 %v154, %v1302
    %v1344 = vmul.f32 %v155, %v1304
    %v1345 = vmul.f32 %v156, %v1306
    %v1346 = vmul.f32 %v157, %v1308
    %v1347 = vmul.f32 %v158, %v1310
    %v1348 = vmul.f32 %v159, %v1312
    %1367 = vrot.lane.b32.xlu0 %v1331, 124
    %v1368 = vpop.permute.xlu0 %1367
    %1369 = vrot.lane.b32.xlu0 %v1332, 124
    %v1370 = vpop.permute.xlu0 %1369
    %1371 = vrot.lane.b32.xlu0 %v1333, 124
    %v1372 = vpop.permute.xlu0 %1371
    %1373 = vrot.lane.b32.xlu0 %v1334, 124
    %v1374 = vpop.permute.xlu0 %1373
    %1375 = vrot.lane.b32.xlu0 %v1335, 124
    %v1376 = vpop.permute.xlu0 %1375
    %1377 = vrot.lane.b32.xlu0 %v1336, 124
    %v1378 = vpop.permute.xlu0 %1377
    %1379 = vrot.lane.b32.xlu0 %v1337, 124
    %v1380 = vpop.permute.xlu0 %1379
    %1381 = vrot.lane.b32.xlu0 %v1338, 124
    %v1382 = vpop.permute.xlu0 %1381
    %1383 = vrot.lane.b32.xlu0 %v1339, 124
    %v1384 = vpop.permute.xlu0 %1383
    %1385 = vrot.lane.b32.xlu0 %v1340, 124
    %v1386 = vpop.permute.xlu0 %1385
    %1387 = vrot.lane.b32.xlu0 %v1341, 124
    %v1388 = vpop.permute.xlu0 %1387
    %1389 = vrot.lane.b32.xlu0 %v1342, 124
    %v1390 = vpop.permute.xlu0 %1389
    %1391 = vrot.lane.b32.xlu0 %v1343, 124
    %v1392 = vpop.permute.xlu0 %1391
    %1393 = vrot.lane.b32.xlu0 %v1344, 124
    %v1394 = vpop.permute.xlu0 %1393
    %1395 = vrot.lane.b32.xlu0 %v1345, 124
    %v1396 = vpop.permute.xlu0 %1395
    %1397 = vrot.lane.b32.xlu0 %v1346, 124
    %v1398 = vpop.permute.xlu0 %1397
    %1399 = vrot.lane.b32.xlu0 %v1347, 124
    %v1400 = vpop.permute.xlu0 %1399
    %1401 = vrot.lane.b32.xlu0 %v1348, 124
    %v1402 = vpop.permute.xlu0 %1401
    %v1421 = vsel %vm898, %v1368, 0.0
    %1422 = vadd.xlane.f32.xlu0 %v1421
    %v1423 = vpop.xlane.xlu0 %1422
    %v1424 = vsel %vm898, %v1370, 0.0
    %1425 = vadd.xlane.f32.xlu0 %v1424
    %v1426 = vpop.xlane.xlu0 %1425
    %v1427 = vsel %vm898, %v1372, 0.0
    %1428 = vadd.xlane.f32.xlu0 %v1427
    %v1429 = vpop.xlane.xlu0 %1428
    %v1430 = vsel %vm898, %v1374, 0.0
    %1431 = vadd.xlane.f32.xlu0 %v1430
    %v1432 = vpop.xlane.xlu0 %1431
    %v1433 = vsel %vm898, %v1376, 0.0
    %1434 = vadd.xlane.f32.xlu0 %v1433
    %v1435 = vpop.xlane.xlu0 %1434
    %v1436 = vsel %vm898, %v1378, 0.0
    %1437 = vadd.xlane.f32.xlu0 %v1436
    %v1438 = vpop.xlane.xlu0 %1437
    %v1439 = vsel %vm898, %v1380, 0.0
    %1440 = vadd.xlane.f32.xlu0 %v1439
    %v1441 = vpop.xlane.xlu0 %1440
    %v1442 = vsel %vm898, %v1382, 0.0
    %1443 = vadd.xlane.f32.xlu0 %v1442
    %v1444 = vpop.xlane.xlu0 %1443
    %v1445 = vsel %vm898, %v1384, 0.0
    %1446 = vadd.xlane.f32.xlu0 %v1445
    %v1447 = vpop.xlane.xlu0 %1446
    %v1448 = vsel %vm898, %v1386, 0.0
    %1449 = vadd.xlane.f32.xlu0 %v1448
    %v1450 = vpop.xlane.xlu0 %1449
    %v1451 = vsel %vm898, %v1388, 0.0
    %1452 = vadd.xlane.f32.xlu0 %v1451
    %v1453 = vpop.xlane.xlu0 %1452
    %v1454 = vsel %vm898, %v1390, 0.0
    %1455 = vadd.xlane.f32.xlu0 %v1454
    %v1456 = vpop.xlane.xlu0 %1455
    %v1457 = vsel %vm898, %v1392, 0.0
    %1458 = vadd.xlane.f32.xlu0 %v1457
    %v1459 = vpop.xlane.xlu0 %1458
    %v1460 = vsel %vm898, %v1394, 0.0
    %1461 = vadd.xlane.f32.xlu0 %v1460
    %v1462 = vpop.xlane.xlu0 %1461
    %v1463 = vsel %vm898, %v1396, 0.0
    %1464 = vadd.xlane.f32.xlu0 %v1463
    %v1465 = vpop.xlane.xlu0 %1464
    %v1466 = vsel %vm898, %v1398, 0.0
    %1467 = vadd.xlane.f32.xlu0 %v1466
    %v1468 = vpop.xlane.xlu0 %1467
    %v1469 = vsel %vm898, %v1400, 0.0
    %1470 = vadd.xlane.f32.xlu0 %v1469
    %v1471 = vpop.xlane.xlu0 %1470
    %v1472 = vsel %vm898, %v1402, 0.0
    %1473 = vadd.xlane.f32.xlu0 %v1472
    %v1474 = vpop.xlane.xlu0 %1473
    %v1475 = vand.u32 2147483647, %v1423
    %v1476 = vand.u32 2147483647, %v1426
    %v1477 = vand.u32 2147483647, %v1429
    %v1478 = vand.u32 2147483647, %v1432
    %v1479 = vand.u32 2147483647, %v1435
    %v1480 = vand.u32 2147483647, %v1438
    %v1481 = vand.u32 2147483647, %v1441
    %v1482 = vand.u32 2147483647, %v1444
    %v1483 = vand.u32 2147483647, %v1447
    %v1484 = vand.u32 2147483647, %v1450
    %v1485 = vand.u32 2147483647, %v1453
    %v1486 = vand.u32 2147483647, %v1456
    %v1487 = vand.u32 2147483647, %v1459
    %v1488 = vand.u32 2147483647, %v1462
    %v1489 = vand.u32 2147483647, %v1465
    %v1490 = vand.u32 2147483647, %v1468
    %v1491 = vand.u32 2147483647, %v1471
    %v1492 = vand.u32 2147483647, %v1474
    %vm1493 = vcmask 7168
    %v1494 = vsel %vm1493, %v90, 0.0
    %v1495 = vsel %vm1493, %v93, 0.0
    %v1496 = vadd.f32 %v1494, %v1495
    %v1497 = vsel %vm1493, %v96, 0.0
    %v1498 = vadd.f32 %v1496, %v1497
    %v1499 = vsel %vm1493, %v99, 0.0
    %v1500 = vadd.f32 %v1498, %v1499
    %v1501 = vsel %vm1493, %v102, 0.0
    %v1502 = vadd.f32 %v1500, %v1501
    %v1503 = vsel %vm1493, %v105, 0.0
    %v1504 = vadd.f32 %v1502, %v1503
    %v1505 = vsel %vm1493, %v108, 0.0
    %v1506 = vadd.f32 %v1504, %v1505
    %v1507 = vsel %vm1493, %v111, 0.0
    %v1508 = vadd.f32 %v1506, %v1507
    %v1509 = vsel %vm1493, %v114, 0.0
    %v1510 = vadd.f32 %v1508, %v1509
    %v1511 = vsel %vm1493, %v117, 0.0
    %v1512 = vadd.f32 %v1510, %v1511
    %v1513 = vsel %vm1493, %v120, 0.0
    %v1514 = vadd.f32 %v1512, %v1513
    %v1515 = vsel %vm1493, %v123, 0.0
    %v1516 = vadd.f32 %v1514, %v1515
    %v1517 = vsel %vm1493, %v126, 0.0
    %v1518 = vadd.f32 %v1516, %v1517
    %v1519 = vsel %vm1493, %v129, 0.0
    %v1520 = vadd.f32 %v1518, %v1519
    %v1521 = vsel %vm1493, %v132, 0.0
    %v1522 = vadd.f32 %v1520, %v1521
    %v1523 = vsel %vm1493, %v135, 0.0
    %v1524 = vadd.f32 %v1522, %v1523
    %v1525 = vsel %vm1493, %v138, 0.0
    %v1526 = vadd.f32 %v1524, %v1525
    %v1527 = vsel %vm1493, %v141, 0.0
    %v1528 = vadd.f32 %v1526, %v1527
    %1529 = vadd.xlane.f32.xlu0 %v1528
    %v1530 = vpop.xlane.xlu0 %1529
    %v1531 = vrot.slane %v1530, 4
    %v1532 = vadd.f32 %v1530, %v1531
    %v1533 = vrot.slane %v1532, 2
    %v1534 = vadd.f32 %v1532, %v1533
    %v1535 = vrot.slane %v1534, 1
    %v1536 = vadd.f32 %v1534, %v1535
    %s1537 = vtos %v1536
    %1556 = vrot.lane.b32.xlu0 %v628, 127
    %v1557 = vpop.permute.xlu0 %1556
    %1558 = vrot.lane.b32.xlu0 %v629, 127
    %v1559 = vpop.permute.xlu0 %1558
    %1560 = vrot.lane.b32.xlu0 %v630, 127
    %v1561 = vpop.permute.xlu0 %1560
    %1562 = vrot.lane.b32.xlu0 %v631, 127
    %v1563 = vpop.permute.xlu0 %1562
    %1564 = vrot.lane.b32.xlu0 %v632, 127
    %v1565 = vpop.permute.xlu0 %1564
    %1566 = vrot.lane.b32.xlu0 %v633, 127
    %v1567 = vpop.permute.xlu0 %1566
    %1568 = vrot.lane.b32.xlu0 %v634, 127
    %v1569 = vpop.permute.xlu0 %1568
    %1570 = vrot.lane.b32.xlu0 %v635, 127
    %v1571 = vpop.permute.xlu0 %1570
    %1572 = vrot.lane.b32.xlu0 %v636, 127
    %v1573 = vpop.permute.xlu0 %1572
    %1574 = vrot.lane.b32.xlu0 %v637, 127
    %v1575 = vpop.permute.xlu0 %1574
    %1576 = vrot.lane.b32.xlu0 %v638, 127
    %v1577 = vpop.permute.xlu0 %1576
    %1578 = vrot.lane.b32.xlu0 %v639, 127
    %v1579 = vpop.permute.xlu0 %1578
    %1580 = vrot.lane.b32.xlu0 %v640, 127
    %v1581 = vpop.permute.xlu0 %1580
    %1582 = vrot.lane.b32.xlu0 %v641, 127
    %v1583 = vpop.permute.xlu0 %1582
    %1584 = vrot.lane.b32.xlu0 %v642, 127
    %v1585 = vpop.permute.xlu0 %1584
    %1586 = vrot.lane.b32.xlu0 %v643, 127
    %v1587 = vpop.permute.xlu0 %1586
    %1588 = vrot.lane.b32.xlu0 %v644, 127
    %v1589 = vpop.permute.xlu0 %1588
    %1590 = vrot.lane.b32.xlu0 %v645, 127
    %v1591 = vpop.permute.xlu0 %1590
    %v1610 = vsel %vm1493, %v1557, 0.0
    %v1611 = vsel %vm1493, %v1559, 0.0
    %v1612 = vadd.f32 %v1610, %v1611
    %v1613 = vsel %vm1493, %v1561, 0.0
    %v1614 = vadd.f32 %v1612, %v1613
    %v1615 = vsel %vm1493, %v1563, 0.0
    %v1616 = vadd.f32 %v1614, %v1615
    %v1617 = vsel %vm1493, %v1565, 0.0
    %v1618 = vadd.f32 %v1616, %v1617
    %v1619 = vsel %vm1493, %v1567, 0.0
    %v1620 = vadd.f32 %v1618, %v1619
    %v1621 = vsel %vm1493, %v1569, 0.0
    %v1622 = vadd.f32 %v1620, %v1621
    %v1623 = vsel %vm1493, %v1571, 0.0
    %v1624 = vadd.f32 %v1622, %v1623
    %v1625 = vsel %vm1493, %v1573, 0.0
    %v1626 = vadd.f32 %v1624, %v1625
    %v1627 = vsel %vm1493, %v1575, 0.0
    %v1628 = vadd.f32 %v1626, %v1627
    %v1629 = vsel %vm1493, %v1577, 0.0
    %v1630 = vadd.f32 %v1628, %v1629
    %v1631 = vsel %vm1493, %v1579, 0.0
    %v1632 = vadd.f32 %v1630, %v1631
    %v1633 = vsel %vm1493, %v1581, 0.0
    %v1634 = vadd.f32 %v1632, %v1633
    %v1635 = vsel %vm1493, %v1583, 0.0
    %v1636 = vadd.f32 %v1634, %v1635
    %v1637 = vsel %vm1493, %v1585, 0.0
    %v1638 = vadd.f32 %v1636, %v1637
    %v1639 = vsel %vm1493, %v1587, 0.0
    %v1640 = vadd.f32 %v1638, %v1639
    %v1641 = vsel %vm1493, %v1589, 0.0
    %v1642 = vadd.f32 %v1640, %v1641
    %v1643 = vsel %vm1493, %v1591, 0.0
    %v1644 = vadd.f32 %v1642, %v1643
    %1645 = vadd.xlane.f32.xlu0 %v1644
    %v1646 = vpop.xlane.xlu0 %1645
    %v1647 = vrot.slane %v1646, 4
    %v1648 = vadd.f32 %v1646, %v1647
    %v1649 = vrot.slane %v1648, 2
    %v1650 = vadd.f32 %v1648, %v1649
    %v1651 = vrot.slane %v1650, 1
    %v1652 = vadd.f32 %v1650, %v1651
    %s1653 = vtos %v1652
    %1654 = vrot.lane.b32.xlu0 %v628, 125
    %v1655 = vpop.permute.xlu0 %1654
    %1656 = vrot.lane.b32.xlu0 %v629, 125
    %v1657 = vpop.permute.xlu0 %1656
    %1658 = vrot.lane.b32.xlu0 %v630, 125
    %v1659 = vpop.permute.xlu0 %1658
    %1660 = vrot.lane.b32.xlu0 %v631, 125
    %v1661 = vpop.permute.xlu0 %1660
    %1662 = vrot.lane.b32.xlu0 %v632, 125
    %v1663 = vpop.permute.xlu0 %1662
    %1664 = vrot.lane.b32.xlu0 %v633, 125
    %v1665 = vpop.permute.xlu0 %1664
    %1666 = vrot.lane.b32.xlu0 %v634, 125
    %v1667 = vpop.permute.xlu0 %1666
    %1668 = vrot.lane.b32.xlu0 %v635, 125
    %v1669 = vpop.permute.xlu0 %1668
    %1670 = vrot.lane.b32.xlu0 %v636, 125
    %v1671 = vpop.permute.xlu0 %1670
    %1672 = vrot.lane.b32.xlu0 %v637, 125
    %v1673 = vpop.permute.xlu0 %1672
    %1674 = vrot.lane.b32.xlu0 %v638, 125
    %v1675 = vpop.permute.xlu0 %1674
    %1676 = vrot.lane.b32.xlu0 %v639, 125
    %v1677 = vpop.permute.xlu0 %1676
    %1678 = vrot.lane.b32.xlu0 %v640, 125
    %v1679 = vpop.permute.xlu0 %1678
    %1680 = vrot.lane.b32.xlu0 %v641, 125
    %v1681 = vpop.permute.xlu0 %1680
    %1682 = vrot.lane.b32.xlu0 %v642, 125
    %v1683 = vpop.permute.xlu0 %1682
    %1684 = vrot.lane.b32.xlu0 %v643, 125
    %v1685 = vpop.permute.xlu0 %1684
    %1686 = vrot.lane.b32.xlu0 %v644, 125
    %v1687 = vpop.permute.xlu0 %1686
    %1688 = vrot.lane.b32.xlu0 %v645, 125
    %v1689 = vpop.permute.xlu0 %1688
    %v1708 = vsel %vm1493, %v1655, 0.0
    %v1709 = vsel %vm1493, %v1657, 0.0
    %v1710 = vadd.f32 %v1708, %v1709
    %v1711 = vsel %vm1493, %v1659, 0.0
    %v1712 = vadd.f32 %v1710, %v1711
    %v1713 = vsel %vm1493, %v1661, 0.0
    %v1714 = vadd.f32 %v1712, %v1713
    %v1715 = vsel %vm1493, %v1663, 0.0
    %v1716 = vadd.f32 %v1714, %v1715
    %v1717 = vsel %vm1493, %v1665, 0.0
    %v1718 = vadd.f32 %v1716, %v1717
    %v1719 = vsel %vm1493, %v1667, 0.0
    %v1720 = vadd.f32 %v1718, %v1719
    %v1721 = vsel %vm1493, %v1669, 0.0
    %v1722 = vadd.f32 %v1720, %v1721
    %v1723 = vsel %vm1493, %v1671, 0.0
    %v1724 = vadd.f32 %v1722, %v1723
    %v1725 = vsel %vm1493, %v1673, 0.0
    %v1726 = vadd.f32 %v1724, %v1725
    %v1727 = vsel %vm1493, %v1675, 0.0
    %v1728 = vadd.f32 %v1726, %v1727
    %v1729 = vsel %vm1493, %v1677, 0.0
    %v1730 = vadd.f32 %v1728, %v1729
    %v1731 = vsel %vm1493, %v1679, 0.0
    %v1732 = vadd.f32 %v1730, %v1731
    %v1733 = vsel %vm1493, %v1681, 0.0
    %v1734 = vadd.f32 %v1732, %v1733
    %v1735 = vsel %vm1493, %v1683, 0.0
    %v1736 = vadd.f32 %v1734, %v1735
    %v1737 = vsel %vm1493, %v1685, 0.0
    %v1738 = vadd.f32 %v1736, %v1737
    %v1739 = vsel %vm1493, %v1687, 0.0
    %v1740 = vadd.f32 %v1738, %v1739
    %v1741 = vsel %vm1493, %v1689, 0.0
    %v1742 = vadd.f32 %v1740, %v1741
    %1743 = vadd.xlane.f32.xlu0 %v1742
    %v1744 = vpop.xlane.xlu0 %1743
    %v1745 = vrot.slane %v1744, 4
    %v1746 = vadd.f32 %v1744, %v1745
    %v1747 = vrot.slane %v1746, 2
    %v1748 = vadd.f32 %v1746, %v1747
    %v1749 = vrot.slane %v1748, 1
    %v1750 = vadd.f32 %v1748, %v1749
    %s1751 = vtos %v1750
    %v1752 = vsel %vm1493, %v971, 0.0
    %v1753 = vsel %vm1493, %v972, 0.0
    %v1754 = vadd.f32 %v1752, %v1753
    %v1755 = vsel %vm1493, %v973, 0.0
    %v1756 = vadd.f32 %v1754, %v1755
    %v1757 = vsel %vm1493, %v974, 0.0
    %v1758 = vadd.f32 %v1756, %v1757
    %v1759 = vsel %vm1493, %v975, 0.0
    %v1760 = vadd.f32 %v1758, %v1759
    %v1761 = vsel %vm1493, %v976, 0.0
    %v1762 = vadd.f32 %v1760, %v1761
    %v1763 = vsel %vm1493, %v977, 0.0
    %v1764 = vadd.f32 %v1762, %v1763
    %v1765 = vsel %vm1493, %v978, 0.0
    %v1766 = vadd.f32 %v1764, %v1765
    %v1767 = vsel %vm1493, %v979, 0.0
    %v1768 = vadd.f32 %v1766, %v1767
    %v1769 = vsel %vm1493, %v980, 0.0
    %v1770 = vadd.f32 %v1768, %v1769
    %v1771 = vsel %vm1493, %v981, 0.0
    %v1772 = vadd.f32 %v1770, %v1771
    %v1773 = vsel %vm1493, %v982, 0.0
    %v1774 = vadd.f32 %v1772, %v1773
    %v1775 = vsel %vm1493, %v983, 0.0
    %v1776 = vadd.f32 %v1774, %v1775
    %v1777 = vsel %vm1493, %v984, 0.0
    %v1778 = vadd.f32 %v1776, %v1777
    %v1779 = vsel %vm1493, %v985, 0.0
    %v1780 = vadd.f32 %v1778, %v1779
    %v1781 = vsel %vm1493, %v986, 0.0
    %v1782 = vadd.f32 %v1780, %v1781
    %v1783 = vsel %vm1493, %v987, 0.0
    %v1784 = vadd.f32 %v1782, %v1783
    %v1785 = vsel %vm1493, %v988, 0.0
    %v1786 = vadd.f32 %v1784, %v1785
    %1787 = vadd.xlane.f32.xlu0 %v1786
    %v1788 = vpop.xlane.xlu0 %1787
    %v1789 = vrot.slane %v1788, 4
    %v1790 = vadd.f32 %v1788, %v1789
    %v1791 = vrot.slane %v1790, 2
    %v1792 = vadd.f32 %v1790, %v1791
    %v1793 = vrot.slane %v1792, 1
    %v1794 = vadd.f32 %v1792, %v1793
    %s1795 = vtos %v1794
    %v1796 = vsel %vm1493, %v1241, 0.0
    %v1797 = vsel %vm1493, %v1242, 0.0
    %v1798 = vadd.f32 %v1796, %v1797
    %v1799 = vsel %vm1493, %v1243, 0.0
    %v1800 = vadd.f32 %v1798, %v1799
    %v1801 = vsel %vm1493, %v1244, 0.0
    %v1802 = vadd.f32 %v1800, %v1801
    %v1803 = vsel %vm1493, %v1245, 0.0
    %v1804 = vadd.f32 %v1802, %v1803
    %v1805 = vsel %vm1493, %v1246, 0.0
    %v1806 = vadd.f32 %v1804, %v1805
    %v1807 = vsel %vm1493, %v1247, 0.0
    %v1808 = vadd.f32 %v1806, %v1807
    %v1809 = vsel %vm1493, %v1248, 0.0
    %v1810 = vadd.f32 %v1808, %v1809
    %v1811 = vsel %vm1493, %v1249, 0.0
    %v1812 = vadd.f32 %v1810, %v1811
    %v1813 = vsel %vm1493, %v1250, 0.0
    %v1814 = vadd.f32 %v1812, %v1813
    %v1815 = vsel %vm1493, %v1251, 0.0
    %v1816 = vadd.f32 %v1814, %v1815
    %v1817 = vsel %vm1493, %v1252, 0.0
    %v1818 = vadd.f32 %v1816, %v1817
    %v1819 = vsel %vm1493, %v1253, 0.0
    %v1820 = vadd.f32 %v1818, %v1819
    %v1821 = vsel %vm1493, %v1254, 0.0
    %v1822 = vadd.f32 %v1820, %v1821
    %v1823 = vsel %vm1493, %v1255, 0.0
    %v1824 = vadd.f32 %v1822, %v1823
    %v1825 = vsel %vm1493, %v1256, 0.0
    %v1826 = vadd.f32 %v1824, %v1825
    %v1827 = vsel %vm1493, %v1257, 0.0
    %v1828 = vadd.f32 %v1826, %v1827
    %v1829 = vsel %vm1493, %v1258, 0.0
    %v1830 = vadd.f32 %v1828, %v1829
    %1831 = vadd.xlane.f32.xlu0 %v1830
    %v1832 = vpop.xlane.xlu0 %1831
    %v1833 = vrot.slane %v1832, 4
    %v1834 = vadd.f32 %v1832, %v1833
    %v1835 = vrot.slane %v1834, 2
    %v1836 = vadd.f32 %v1834, %v1835
    %v1837 = vrot.slane %v1836, 1
    %v1838 = vadd.f32 %v1836, %v1837
    %s1839 = vtos %v1838
    %v1840 = vsel %vm1493, %v1475, 0.0
    %v1841 = vsel %vm1493, %v1476, 0.0
    %v1842 = vadd.f32 %v1840, %v1841
    %v1843 = vsel %vm1493, %v1477, 0.0
    %v1844 = vadd.f32 %v1842, %v1843
    %v1845 = vsel %vm1493, %v1478, 0.0
    %v1846 = vadd.f32 %v1844, %v1845
    %v1847 = vsel %vm1493, %v1479, 0.0
    %v1848 = vadd.f32 %v1846, %v1847
    %v1849 = vsel %vm1493, %v1480, 0.0
    %v1850 = vadd.f32 %v1848, %v1849
    %v1851 = vsel %vm1493, %v1481, 0.0
    %v1852 = vadd.f32 %v1850, %v1851
    %v1853 = vsel %vm1493, %v1482, 0.0
    %v1854 = vadd.f32 %v1852, %v1853
    %v1855 = vsel %vm1493, %v1483, 0.0
    %v1856 = vadd.f32 %v1854, %v1855
    %v1857 = vsel %vm1493, %v1484, 0.0
    %v1858 = vadd.f32 %v1856, %v1857
    %v1859 = vsel %vm1493, %v1485, 0.0
    %v1860 = vadd.f32 %v1858, %v1859
    %v1861 = vsel %vm1493, %v1486, 0.0
    %v1862 = vadd.f32 %v1860, %v1861
    %v1863 = vsel %vm1493, %v1487, 0.0
    %v1864 = vadd.f32 %v1862, %v1863
    %v1865 = vsel %vm1493, %v1488, 0.0
    %v1866 = vadd.f32 %v1864, %v1865
    %v1867 = vsel %vm1493, %v1489, 0.0
    %v1868 = vadd.f32 %v1866, %v1867
    %v1869 = vsel %vm1493, %v1490, 0.0
    %v1870 = vadd.f32 %v1868, %v1869
    %v1871 = vsel %vm1493, %v1491, 0.0
    %v1872 = vadd.f32 %v1870, %v1871
    %v1873 = vsel %vm1493, %v1492, 0.0
    %v1874 = vadd.f32 %v1872, %v1873
    %1875 = vadd.xlane.f32.xlu0 %v1874
    %v1876 = vpop.xlane.xlu0 %1875
    %v1877 = vrot.slane %v1876, 4
    %v1878 = vadd.f32 %v1876, %v1877
    %v1879 = vrot.slane %v1878, 2
    %v1880 = vadd.f32 %v1878, %v1879
    %v1881 = vrot.slane %v1880, 1
    %v1882 = vadd.f32 %v1880, %v1881
    %s1883 = vtos %v1882
    %v1884 = vlaneseq
    %v1885 = vshrl.u32 %v1884, 7
    %vm1886 = vcmp.eq.s32.totalorder %v1885, 0
    %v1887 = vstv %s1537
    %v1888 = vsel %vm1886, %v1887, 0.0
    %vm1889 = vcmp.eq.s32.totalorder %v1885, 1
    %v1890 = vstv %s1653
    %v1891 = vsel %vm1889, %v1890, 0.0
    %v1892 = vadd.f32 %v1888, %v1891
    %vm1893 = vcmp.eq.s32.totalorder %v1885, 2
    %v1894 = vstv %s1751
    %v1895 = vsel %vm1893, %v1894, 0.0
    %v1896 = vadd.f32 %v1892, %v1895
    %vm1897 = vcmp.eq.s32.totalorder %v1885, 3
    %v1898 = vstv %s1795
    %v1899 = vsel %vm1897, %v1898, 0.0
    %v1900 = vadd.f32 %v1896, %v1899
    %vm1901 = vcmp.eq.s32.totalorder %v1885, 4
    %v1902 = vstv %s1839
    %v1903 = vsel %vm1901, %v1902, 0.0
    %v1904 = vadd.f32 %v1900, %v1903
    %vm1905 = vcmp.eq.s32.totalorder %v1885, 5
    %v1906 = vstv %s1883
    %v1907 = vsel %vm1905, %v1906, 0.0
    %v1908 = vadd.f32 %v1904, %v1907
    %1909 = vst [vmem:[#allocation2] sm:$0xff] %v1908
    // Predicated region
    $region14: #{tpu_custom_call.1} parent=1 // pred_check
      _
    $region15: #{tpu_custom_call.1} parent=1 // pred_check_branch
      %1911 = sbr.rel (0) target = $region17
    $region16: #{tpu_custom_call.1} parent=1 // pred_region
      %s1913 = ssub.s32 128, 128
      %1914 = vsyncadd [#allocation3], %s1913
      %s1916 = sshll.u32 [#allocation2], 4
      %s1917 = int_to_ptr.vmem [resolvable:$true] %s1916
      %1919 = dma.vmem_to_hbm [thread:$0]  %s1917, 128, %s3, [#allocation3]
    $region17: #{tpu_custom_call.1} parent=1 // pred_fallthru
      _
    // Predicated region
    $region18: #{tpu_custom_call.1} parent=1 // pred_check
      _
    $region19: #{tpu_custom_call.1} parent=1 // pred_check_branch
      %1921 = sbr.rel (0) target = $region21
    $region20: #{tpu_custom_call.1} parent=1 // pred_region
      %1922 = dma.done [#allocation3], 128
    $region21: #{tpu_custom_call.1} parent=1 // pred_fallthru
      _
    %1923 = vsyncpa [#allocation3], 1

</llo_original>
